<compile_context>
chip_gen: v7x
topology: tpu7x:2x2x1
jax: 0.10.0
libtpu: 0.0.40
codegen_flags: <defaults>
</compile_context>

<pallas_src>
import functools

import jax
import jax.numpy as jnp
from jax.experimental import pallas as pl
from jax.experimental.pallas import tpu as pltpu

LOGVAR_INIT = -5.0
MU_INIT = 0.0


def _stable_softplus(x):
    # Numerically stable softplus; matches F.softplus (beta=1) / jax.nn.softplus.
    return jnp.maximum(x, 0.0) + jnp.log1p(jnp.exp(-jnp.abs(x)))


def _finish_tile(partial, b_ref, o_ref, scratch, nk):
    """Bias-add + store; uses the f32 VMEM accumulator only when nk > 1."""
    if nk == 1:
        o_ref[...] = (partial + b_ref[...]).astype(o_ref.dtype)
    else:
        acc_ref, = scratch
        k = pl.program_id(2)

        @pl.when(k == 0)
        def _init():
            acc_ref[...] = jnp.zeros_like(acc_ref)

        acc_ref[...] += partial

        @pl.when(k == nk - 1)
        def _store():
            o_ref[...] = (acc_ref[...] + b_ref[...]).astype(o_ref.dtype)


def _fused_kernel(x_ref, mu_w_ref, rho_w_ref, eps_w_ref, b_ref, o_ref, *scratch, nk):
    # Reparameterize the (tk, tn) weight tile in f32; MXU inputs are bf16,
    # accumulation stays f32.
    std_w = _stable_softplus(rho_w_ref[...])
    w = (mu_w_ref[...] + std_w * eps_w_ref[...].astype(jnp.float32)).astype(jnp.bfloat16)
    partial = jnp.dot(x_ref[...], w, preferred_element_type=jnp.float32)
    _finish_tile(partial, b_ref, o_ref, scratch, nk)


def _matmul_bias_kernel(x_ref, w_ref, b_ref, o_ref, *scratch, nk):
    # Pre-materialized bf16 weight path.
    partial = jnp.dot(x_ref[...], w_ref[...], preferred_element_type=jnp.float32)
    _finish_tile(partial, b_ref, o_ref, scratch, nk)


def _round_up(x, m):
    return (x + m - 1) // m * m


def _choose_tile(padded, align, max_tile, min_splits=1):
    """Largest multiple of `align` dividing `padded`, <= max_tile; prefer tiles
    leaving padded // tile >= min_splits when achievable."""
    cands = [t for t in range(align, min(padded, max_tile) + 1, align) if padded % t == 0]
    good = [t for t in cands if padded // t >= min_splits]
    pool = good if good else cands
    return max(pool) if pool else align


@functools.partial(jax.jit, static_argnames=("bm", "bn", "bk"))
def bayesian_linear(x, mu_weight, rho_weight, eps_weight,
                    mu_bias, rho_bias, eps_bias, *, bm=256, bn=256, bk=1024):
    """x: (B, in); weight params: (out, in); bias params: (out,). Returns (B, out) f32."""
    B, K = x.shape
    N, _ = mu_weight.shape

    # Bias reparameterization is tiny -> plain JAX in the wrapper.
    bias = (mu_bias.astype(jnp.float32)
            + jax.nn.softplus(rho_bias.astype(jnp.float32)) * eps_bias.astype(jnp.float32))

    Kp = _round_up(K, 128)
    Np = _round_up(N, 128)

    # Batch tile: multiple of 16 (bf16 LHS sublane packing).
    if B <= bm:
        tm = _round_up(B, 16)
        Bp = tm
    else:
        tm = bm
        Bp = _round_up(B, tm)
    single_batch_tile = (Bp // tm == 1)

    # Keep >=2 steps on the out axis when batch has only one tile, so both v7x
    # TensorCores get work.
    tn = _choose_tile(Np, 128, bn, min_splits=2 if single_batch_tile else 1)
    tk = _choose_tile(Kp, 128, bk)
    nk = Kp // tk

    # Zero padding is benign: padded mu/eps are 0 -> padded weights/bias are 0,
    # padded `in` columns contribute nothing, padded rows/cols are sliced off below.
    xp = jnp.pad(x.astype(jnp.bfloat16), ((0, Bp - B), (0, Kp - K)))
    bp = jnp.pad(bias, (0, Np - N)).reshape(1, Np)

    grid = (Bp // tm, Np // tn, nk)
    x_spec = pl.BlockSpec((tm, tk), lambda i, j, k: (i, k))
    w_spec = pl.BlockSpec((tk, tn), lambda i, j, k: (k, j))
    b_spec = pl.BlockSpec((1, tn), lambda i, j, k: (0, j))
    o_spec = pl.BlockSpec((tm, tn), lambda i, j, k: (i, j))
    scratch_shapes = [] if nk == 1 else [pltpu.VMEM((tm, tn), jnp.float32)]

    if single_batch_tile:
        # Fused path: each weight element is read exactly once, so reparameterize
        # in-kernel. Params pre-transposed to (K, N) -> plain MXU matmul.
        mw = jnp.pad(mu_weight.astype(jnp.float32).T, ((0, Kp - K), (0, Np - N)))
        rw = jnp.pad(rho_weight.astype(jnp.float32).T, ((0, Kp - K), (0, Np - N)))
        ew = jnp.pad(eps_weight.T, ((0, Kp - K), (0, Np - N)))  # caller dtype (bf16 ok)
        kernel = functools.partial(_fused_kernel, nk=nk)
        operands = (xp, mw, rw, ew, bp)
        in_specs = [x_spec, w_spec, w_spec, w_spec, b_spec]
        eps_bytes = jnp.dtype(ew.dtype).itemsize
        cost = pl.CostEstimate(
            flops=2 * Bp * Kp * Np + 4 * Kp * Np,
            transcendentals=2 * Kp * Np,
            bytes_accessed=(2 * Bp * Kp * (Np // tn) + (8 + eps_bytes) * Kp * Np
                            + 4 * Np + 4 * Bp * Np),
        )
    else:
        # Materialized path: build bf16 w once in plain JAX, stream 2 B/element.
        w = (mu_weight.astype(jnp.float32)
             + jax.nn.softplus(rho_weight.astype(jnp.float32)) * eps_weight.astype(jnp.float32))
        wt = jnp.pad(w.T.astype(jnp.bfloat16), ((0, Kp - K), (0, Np - N)))
        kernel = functools.partial(_matmul_bias_kernel, nk=nk)
        operands = (xp, wt, bp)
        in_specs = [x_spec, w_spec, b_spec]
        cost = pl.CostEstimate(
            flops=2 * Bp * Kp * Np,
            transcendentals=0,
            bytes_accessed=(2 * Bp * Kp * (Np // tn) + 2 * Kp * Np * (Bp // tm)
                            + 4 * Np + 4 * Bp * Np),
        )

    out_padded = pl.pallas_call(
        kernel,
        out_shape=jax.ShapeDtypeStruct((Bp, Np), jnp.float32),
        grid_spec=pltpu.PrefetchScalarGridSpec(
            num_scalar_prefetch=0,
            grid=grid,
            in_specs=in_specs,
            out_specs=o_spec,
            scratch_shapes=scratch_shapes,
        ),
        compiler_params=pltpu.CompilerParams(
            dimension_semantics=("parallel", "parallel", "arbitrary"),
            vmem_limit_bytes=48 * 1024 * 1024,
        ),
        cost_estimate=cost,
    )(*operands)

    return out_padded[:B, :N]


def _run_case(name, key, batch, in_features, out_features):
    k_x, k_mw, k_rw, k_mb, k_rb, k_ew, k_eb = jax.random.split(key, 7)

    # Deterministic parameter init mirroring the PyTorch module's __init__.
    mu_weight = MU_INIT + 0.1 * jax.random.normal(k_mw, (out_features, in_features), jnp.float32)
    rho_weight = LOGVAR_INIT + 0.1 * jax.random.normal(k_rw, (out_features, in_features), jnp.float32)
    mu_bias = MU_INIT + 0.1 * jax.random.normal(k_mb, (out_features,), jnp.float32)
    rho_bias = LOGVAR_INIT + 0.1 * jax.random.normal(k_rb, (out_features,), jnp.float32)

    # Noise (torch.randn_like equivalent), drawn once deterministically; stored as
    # bf16 to shrink the dominant weight HBM stream (bf16-rounded N(0,1) noise is
    # distributionally equivalent for the reparameterization).
    eps_weight = jax.random.normal(k_ew, (out_features, in_features), jnp.bfloat16)
    eps_bias = jax.random.normal(k_eb, (out_features,), jnp.float32)

    x = jax.random.normal(k_x, (batch, in_features), jnp.float32)

    out = bayesian_linear(x, mu_weight, rho_weight, eps_weight, mu_bias, rho_bias, eps_bias)
    out = jax.block_until_ready(out)

    # Pure-JAX references.
    w_ref = mu_weight + jax.nn.softplus(rho_weight) * eps_weight.astype(jnp.float32)
    b_ref = mu_bias + jax.nn.softplus(rho_bias) * eps_bias
    ref_bf16 = jnp.dot(x.astype(jnp.bfloat16), w_ref.astype(jnp.bfloat16).T,
                       preferred_element_type=jnp.float32) + b_ref
    ref_f32 = x @ w_ref.T + b_ref

    assert out.shape == (batch, out_features), (name, out.shape)
    # Tight check vs. a reference using the same bf16-in / f32-accumulate matmul.
    err_bf16 = float(jnp.max(jnp.abs(out - ref_bf16)))
    assert jnp.allclose(out, ref_bf16, atol=3e-3, rtol=3e-3), (name, err_bf16)
    # Looser sanity check vs. the pure-f32 reference (bf16 input quantization).
    err_f32 = float(jnp.max(jnp.abs(out - ref_f32)))
    assert jnp.allclose(out, ref_f32, atol=1e-1, rtol=5e-2), (name, err_f32)


if __name__ == "__main__":
    key = jax.random.PRNGKey(0)
    k1, k2 = jax.random.split(key)
    # Case 1: small batch -> fused in-kernel reparameterization, single-k grid
    # (no accumulator), out axis split in two (both v7x TCs busy).
    _run_case("fused", k1, batch=24, in_features=300, out_features=200)
    # Case 2: batch spans multiple tiles + multi-step K reduction -> pre-materialized
    # bf16-weight matmul path exercising the f32 VMEM accumulator.
    _run_case("materialized", k2, batch=300, in_features=1152, out_features=256)
    print("KERNEL_OK")
</pallas_src>

<mosaic_0001>
module attributes {stable_mosaic.version = 11 : i64} {
  func.func @_fused_kernel(%arg0: i32, %arg1: i32, %arg2: i32, %arg3: memref<32x384xbf16, #tpu.memory_space<vmem>>, %arg4: memref<384x128xf32, #tpu.memory_space<vmem>>, %arg5: memref<384x128xf32, #tpu.memory_space<vmem>>, %arg6: memref<384x128xbf16, #tpu.memory_space<vmem>>, %arg7: memref<1x128xf32, #tpu.memory_space<vmem>>, %arg8: memref<32x128xf32, #tpu.memory_space<vmem>>) attributes {dimension_semantics = [#tpu.dimension_semantics<parallel>, #tpu.dimension_semantics<parallel>, #tpu.dimension_semantics<arbitrary>], iteration_bounds = array<i64: 1, 2, 1>, scalar_prefetch = 0 : i64, scratch_operands = 0 : i64, tpu.core_type = #tpu.core_type<tc>, window_params = [{transform_indices = @transform_0, window_bounds = array<i64: 32, 384>}, {transform_indices = @transform_1, window_bounds = array<i64: 384, 128>}, {transform_indices = @transform_2, window_bounds = array<i64: 384, 128>}, {transform_indices = @transform_3, window_bounds = array<i64: 384, 128>}, {transform_indices = @transform_4, window_bounds = array<i64: 1, 128>}, {transform_indices = @transform_5, window_bounds = array<i64: 32, 128>}]} {
    %c0 = arith.constant 0 : index
    %c0_0 = arith.constant 0 : index
    %0 = vector.load %arg5[%c0, %c0_0] : memref<384x128xf32, #tpu.memory_space<vmem>>, vector<384x128xf32>
    %cst = arith.constant 0.000000e+00 : f32
    %1 = vector.broadcast %cst : f32 to vector<384x128xf32>
    %2 = arith.maximumf %0, %1 : vector<384x128xf32>
    %3 = math.absf %0 : vector<384x128xf32>
    %cst_1 = arith.constant 0.000000e+00 : f32
    %4 = vector.broadcast %cst_1 : f32 to vector<384x128xf32>
    %5 = arith.subf %4, %3 : vector<384x128xf32>
    %6 = math.exp %5 : vector<384x128xf32>
    %7 = math.log1p %6 : vector<384x128xf32>
    %8 = arith.addf %2, %7 : vector<384x128xf32>
    %c0_2 = arith.constant 0 : index
    %c0_3 = arith.constant 0 : index
    %9 = vector.load %arg4[%c0_2, %c0_3] : memref<384x128xf32, #tpu.memory_space<vmem>>, vector<384x128xf32>
    %c0_4 = arith.constant 0 : index
    %c0_5 = arith.constant 0 : index
    %10 = vector.load %arg6[%c0_4, %c0_5] : memref<384x128xbf16, #tpu.memory_space<vmem>>, vector<384x128xbf16>
    %11 = arith.extf %10 : vector<384x128xbf16> to vector<384x128xf32>
    %12 = arith.mulf %8, %11 : vector<384x128xf32>
    %13 = arith.addf %9, %12 : vector<384x128xf32>
    %14 = arith.truncf %13 : vector<384x128xf32> to vector<384x128xbf16>
    %c0_6 = arith.constant 0 : index
    %c0_7 = arith.constant 0 : index
    %15 = vector.load %arg3[%c0_6, %c0_7] : memref<32x384xbf16, #tpu.memory_space<vmem>>, vector<32x384xbf16>
    %cst_8 = arith.constant dense<0.000000e+00> : vector<32x128xf32>
    %16 = tpu.matmul %15, %14, %cst_8 {dimension_numbers = #tpu.dot_dimension_numbers<[1], [0], [0], [1], [0, 0, 1, 1], [], []>} : vector<32x384xbf16>, vector<384x128xbf16>, vector<32x128xf32> -> vector<32x128xf32>
    %c0_9 = arith.constant 0 : index
    %c0_10 = arith.constant 0 : index
    %17 = vector.load %arg7[%c0_9, %c0_10] : memref<1x128xf32, #tpu.memory_space<vmem>>, vector<1x128xf32>
    %18 = vector.broadcast %17 : vector<1x128xf32> to vector<32x128xf32>
    %19 = arith.addf %16, %18 : vector<32x128xf32>
    %c0_11 = arith.constant 0 : index
    %c0_12 = arith.constant 0 : index
    %20 = vector.load %arg8[%c0_11, %c0_12] : memref<32x128xf32, #tpu.memory_space<vmem>>, vector<32x128xf32>
    tpu.vector_store %arg8[%c0_11, %c0_12], %19 {strides = array<i32>} : memref<32x128xf32, #tpu.memory_space<vmem>>, vector<32x128xf32>,
    return
  }
  func.func @transform_0(%arg0: i32, %arg1: i32, %arg2: i32) -> (i32, i32) {
    %c0_i32 = arith.constant 0 : i32
    return %arg0, %arg2 : i32, i32
  }
  func.func @transform_1(%arg0: i32, %arg1: i32, %arg2: i32) -> (i32, i32) {
    %c0_i32 = arith.constant 0 : i32
    return %arg2, %arg1 : i32, i32
  }
  func.func @transform_2(%arg0: i32, %arg1: i32, %arg2: i32) -> (i32, i32) {
    %c0_i32 = arith.constant 0 : i32
    return %arg2, %arg1 : i32, i32
  }
  func.func @transform_3(%arg0: i32, %arg1: i32, %arg2: i32) -> (i32, i32) {
    %c0_i32 = arith.constant 0 : i32
    return %arg2, %arg1 : i32, i32
  }
  func.func @transform_4(%arg0: i32, %arg1: i32, %arg2: i32) -> (i32, i32) {
    %c0_i32 = arith.constant 0 : i32
    %c0_i32_0 = arith.constant 0 : i32
    return %c0_i32, %arg1 : i32, i32
  }
  func.func @transform_5(%arg0: i32, %arg1: i32, %arg2: i32) -> (i32, i32) {
    %c0_i32 = arith.constant 0 : i32
    return %arg0, %arg1 : i32, i32
  }
}

</mosaic_0001>

<llo_original>
// kernel: bayesian_linear.1
$region0: #{bayesian_linear.1}
  #allocation0 [shape = 'u32[]', space=smem, size = 0x4, offset = 0x4, fixed_abs, tag = 'smem constant byte address 0x4 - core index']
  #allocation1 [shape = 'u32[144,128]{1,0:T(1,128)}', space=vmem, size = 0x12000, scoped, tag = 'internal scratch']
  %s0 = inlined_call_operand.vmem [shape: bf16[32,384], index: 0, kind: input, shape index: {}]
  %s1 = inlined_call_operand.vmem [shape: f32[384,256], index: 1, kind: input, shape index: {}]
  %s2 = inlined_call_operand.vmem [shape: f32[384,256], index: 2, kind: input, shape index: {}]
  %s3 = inlined_call_operand.vmem [shape: bf16[384,256], index: 3, kind: input, shape index: {}]
  %s4 = inlined_call_operand.vmem [shape: f32[1,256], index: 4, kind: input, shape index: {}]
  %s5 = inlined_call_operand.vmem [shape: f32[32,256], index: 5, kind: output, shape index: {}]
  %s6 = sld [smem:[#allocation0]]
  $region204: #{bayesian_linear.1} parent=0
    _
  %s8 = ssub.s32 1, %s6
  %s9 = scalar_select 0, %s8, %s6
  $region1: #{bayesian_linear.1} parent=0
    #allocation2 [shape = 'u8[393216]{0}', space=vmem, size = 0x60000, scoped, tag = 'input window, operand 1']
    #allocation3 [shape = 'u8[393216]{0}', space=vmem, size = 0x60000, scoped, tag = 'input window, operand 2']
    #allocation4 [shape = 'u8[196608]{0}', space=vmem, size = 0x30000, scoped, tag = 'input window, operand 3']
    #allocation5 [shape = 'u8[32768]{0}', space=vmem, size = 0x8000, scoped, tag = 'output window, operand 0']
    loop: start=0, step=1, limit=4
    $region2: #{bayesian_linear.1} parent=1 // loop_pre_header
      _
    $region3: #{bayesian_linear.1} parent=1 // loop_header
      %s11 = sphi 0, %s15
      %p12 = scmp.ge.s32.totalorder %s11, 4
      %s18 = sphi 0, %s37
      %s19 = sphi 0, %s33
      %s20 = sphi 0, %s29
      %s21 = sphi 0, %s18
      %s22 = sphi 0, %s19
      %s23 = sphi 0, %s20
      %s24 = sphi 0, %s21
      %s25 = sphi 0, %s22
      %s26 = sphi 0, %s23
      %s42 = sphi 0, %s44
      %s45 = sphi 0, %s42
      %s46 = sphi 0, %s45
      %s62 = sphi 0, %s46
      %s70 = sphi 0, %s72
      %s73 = sphi 0, %s70
      %s74 = sphi 0, %s73
      %s90 = sphi 0, %s74
      %s98 = sphi 0, %s100
      %s101 = sphi 0, %s98
      %s102 = sphi 0, %s101
      %s118 = sphi 0, %s102
      %s126 = sphi 0, %s128
      %s129 = sphi 0, %s126
      %s130 = sphi 0, %s129
      %s146 = sphi 0, %s130
      %s152 = sphi 0, %s154
      %s155 = sphi 0, %s152
      %s156 = sphi 0, %s155
      %s172 = sphi 0, %s156
      %s180 = sphi 0, %s182
      %s183 = sphi 0, %s180
      %s184 = sphi 0, %s183
      %s200 = sphi 0, %s184
    $region4: #{bayesian_linear.1} parent=1 // loop_header_branch
      %14 = sbr.rel (%p12) target = $region8
    $region5: #{bayesian_linear.1} parent=1 // loop_body
      %s16 = ssub.s32 %s11, 1
      %s17 = ssub.s32 %s11, 2
      %s27 = sadd.s32 1, %s20
      %p28 = scmp.ge.s32.totalorder %s27, 1
      %s29 = scalar_select %p28, 0, %s27
      %s30 = sadd.s32 1, %s19
      %s31 = scalar_select %p28, %s30, %s19
      %p32 = scmp.ge.s32.totalorder %s31, 2
      %s33 = scalar_select %p32, 0, %s31
      %s34 = sadd.s32 1, %s18
      %s35 = scalar_select %p32, %s34, %s18
      %p36 = scmp.ge.s32.totalorder %s35, 1
      %s37 = scalar_select %p36, 0, %s35
      %s38 = ssub.s32 %s18, %s37
      %s39 = ssub.s32 %s20, %s29
      %s40 = sor.u32 %s38, %s39
      %p41 = scmp.eq.s32.totalorder %s40, 0
      %s43 = sadd.s32 %s42, 1
      %s44 = scalar_select %p41, %s42, %s43
      %p47 = pneg %p41
      %p48 = scmp.eq.s32.totalorder %s11, 1
      %p49 = por %p47, %p48
      %p50 = scmp.ne.s32.totalorder %s42, %s45
      %p51 = scmp.eq.s32.totalorder %s11, 0
      %p52 = por %p50, %p51
      %p53 = scmp.ne.s32.totalorder %s42, %s45
      %p54 = scmp.eq.s32.totalorder %s16, 1
      %p55 = por %p53, %p54
      %p56 = scmp.ne.s32.totalorder %s45, %s46
      %p57 = scmp.eq.s32.totalorder %s16, 0
      %p58 = por %p56, %p57
      %p59 = scmp.ne.s32.totalorder %s45, %s46
      %p60 = scmp.eq.s32.totalorder %s17, 1
      %p61 = por %p59, %p60
      %p63 = scmp.ne.s32.totalorder %s46, %s62
      %p64 = scmp.eq.s32.totalorder %s17, 0
      %p65 = por %p63, %p64
      %s66 = ssub.s32 %s20, %s29
      %s67 = ssub.s32 %s19, %s33
      %s68 = sor.u32 %s66, %s67
      %p69 = scmp.eq.s32.totalorder %s68, 0
      %s71 = sadd.s32 %s70, 1
      %s72 = scalar_select %p69, %s70, %s71
      %p75 = pneg %p69
      %p76 = scmp.eq.s32.totalorder %s11, 1
      %p77 = por %p75, %p76
      %p78 = scmp.ne.s32.totalorder %s70, %s73
      %p79 = scmp.eq.s32.totalorder %s11, 0
      %p80 = por %p78, %p79
      %p81 = scmp.ne.s32.totalorder %s70, %s73
      %p82 = scmp.eq.s32.totalorder %s16, 1
      %p83 = por %p81, %p82
      %p84 = scmp.ne.s32.totalorder %s73, %s74
      %p85 = scmp.eq.s32.totalorder %s16, 0
      %p86 = por %p84, %p85
      %p87 = scmp.ne.s32.totalorder %s73, %s74
      %p88 = scmp.eq.s32.totalorder %s17, 1
      %p89 = por %p87, %p88
      %p91 = scmp.ne.s32.totalorder %s74, %s90
      %p92 = scmp.eq.s32.totalorder %s17, 0
      %p93 = por %p91, %p92
      %s94 = ssub.s32 %s20, %s29
      %s95 = ssub.s32 %s19, %s33
      %s96 = sor.u32 %s94, %s95
      %p97 = scmp.eq.s32.totalorder %s96, 0
      %s99 = sadd.s32 %s98, 1
      %s100 = scalar_select %p97, %s98, %s99
      %p103 = pneg %p97
      %p104 = scmp.eq.s32.totalorder %s11, 1
      %p105 = por %p103, %p104
      %p106 = scmp.ne.s32.totalorder %s98, %s101
      %p107 = scmp.eq.s32.totalorder %s11, 0
      %p108 = por %p106, %p107
      %p109 = scmp.ne.s32.totalorder %s98, %s101
      %p110 = scmp.eq.s32.totalorder %s16, 1
      %p111 = por %p109, %p110
      %p112 = scmp.ne.s32.totalorder %s101, %s102
      %p113 = scmp.eq.s32.totalorder %s16, 0
      %p114 = por %p112, %p113
      %p115 = scmp.ne.s32.totalorder %s101, %s102
      %p116 = scmp.eq.s32.totalorder %s17, 1
      %p117 = por %p115, %p116
      %p119 = scmp.ne.s32.totalorder %s102, %s118
      %p120 = scmp.eq.s32.totalorder %s17, 0
      %p121 = por %p119, %p120
      %s122 = ssub.s32 %s20, %s29
      %s123 = ssub.s32 %s19, %s33
      %s124 = sor.u32 %s122, %s123
      %p125 = scmp.eq.s32.totalorder %s124, 0
      %s127 = sadd.s32 %s126, 1
      %s128 = scalar_select %p125, %s126, %s127
      %p131 = pneg %p125
      %p132 = scmp.eq.s32.totalorder %s11, 1
      %p133 = por %p131, %p132
      %p134 = scmp.ne.s32.totalorder %s126, %s129
      %p135 = scmp.eq.s32.totalorder %s11, 0
      %p136 = por %p134, %p135
      %p137 = scmp.ne.s32.totalorder %s126, %s129
      %p138 = scmp.eq.s32.totalorder %s16, 1
      %p139 = por %p137, %p138
      %p140 = scmp.ne.s32.totalorder %s129, %s130
      %p141 = scmp.eq.s32.totalorder %s16, 0
      %p142 = por %p140, %p141
      %p143 = scmp.ne.s32.totalorder %s129, %s130
      %p144 = scmp.eq.s32.totalorder %s17, 1
      %p145 = por %p143, %p144
      %p147 = scmp.ne.s32.totalorder %s130, %s146
      %p148 = scmp.eq.s32.totalorder %s17, 0
      %p149 = por %p147, %p148
      %s150 = ssub.s32 %s19, %s33
      %p151 = scmp.eq.s32.totalorder %s150, 0
      %s153 = sadd.s32 %s152, 1
      %s154 = scalar_select %p151, %s152, %s153
      %p157 = pneg %p151
      %p158 = scmp.eq.s32.totalorder %s11, 1
      %p159 = por %p157, %p158
      %p160 = scmp.ne.s32.totalorder %s152, %s155
      %p161 = scmp.eq.s32.totalorder %s11, 0
      %p162 = por %p160, %p161
      %p163 = scmp.ne.s32.totalorder %s152, %s155
      %p164 = scmp.eq.s32.totalorder %s16, 1
      %p165 = por %p163, %p164
      %p166 = scmp.ne.s32.totalorder %s155, %s156
      %p167 = scmp.eq.s32.totalorder %s16, 0
      %p168 = por %p166, %p167
      %p169 = scmp.ne.s32.totalorder %s155, %s156
      %p170 = scmp.eq.s32.totalorder %s17, 1
      %p171 = por %p169, %p170
      %p173 = scmp.ne.s32.totalorder %s156, %s172
      %p174 = scmp.eq.s32.totalorder %s17, 0
      %p175 = por %p173, %p174
      %s176 = ssub.s32 %s18, %s37
      %s177 = ssub.s32 %s19, %s33
      %s178 = sor.u32 %s176, %s177
      %p179 = scmp.eq.s32.totalorder %s178, 0
      %s181 = sadd.s32 %s180, 1
      %s182 = scalar_select %p179, %s180, %s181
      %p185 = pneg %p179
      %p186 = scmp.eq.s32.totalorder %s11, 1
      %p187 = por %p185, %p186
      %p188 = scmp.ne.s32.totalorder %s180, %s183
      %p189 = scmp.eq.s32.totalorder %s11, 0
      %p190 = por %p188, %p189
      %p191 = scmp.ne.s32.totalorder %s180, %s183
      %p192 = scmp.eq.s32.totalorder %s16, 1
      %p193 = por %p191, %p192
      %p194 = scmp.ne.s32.totalorder %s183, %s184
      %p195 = scmp.eq.s32.totalorder %s16, 0
      %p196 = por %p194, %p195
      %p197 = scmp.ne.s32.totalorder %s183, %s184
      %p198 = scmp.eq.s32.totalorder %s17, 1
      %p199 = por %p197, %p198
      %p201 = scmp.ne.s32.totalorder %s184, %s200
      %p202 = scmp.eq.s32.totalorder %s17, 0
      %p203 = por %p201, %p202
      %p204 = scmp.le.s32.totalorder 1, %s11
      %p205 = scmp.lt.s32.totalorder %s11, 3
      %p206 = pnand %p204, %p205
      %p207 = pneg %p206
      // Predicated region
      $region9: #{bayesian_linear.1} parent=5 // pred_check
        _
      $region10: #{bayesian_linear.1} parent=5 // pred_check_branch
        %209 = sbr.rel (%p206) target = $region12
      $region11: #{bayesian_linear.1} parent=5 // pred_region
        %s210 = ssub.s32 %s11, 1
        // Predicated region
        $region13: #{bayesian_linear.1} parent=11 // pred_check
          %p211 = pneg %p58
        $region14: #{bayesian_linear.1} parent=11 // pred_check_branch
          %213 = sbr.rel (%p211) target = $region16
        $region15: #{bayesian_linear.1} parent=11 // pred_region
          %s214 = smul.u32 4, %s21
          %s215 = smul.u32 3, %s23
          %p216 = scmp.lt.s32.totalorder %s214, 3
          %s217 = scalar_select %p216, %s214, 3
          %p218 = scmp.lt.s32.totalorder %s215, 2
          %s219 = scalar_select %p218, %s215, 2
          %s220 = smul.addr %s217, 3
          %s221 = sadd.s32 %s219, %s220
          %s222 = smul.addr %s221, 4
          %s223 = scalar_lea.vmem %s0, %s222
          %s224 = smul.u32 4, %s21
          %s225 = smul.u32 3, %s23
        $region16: #{bayesian_linear.1} parent=11 // pred_fallthru
          _
      $region12: #{bayesian_linear.1} parent=5 // pred_fallthru
        _
      %p226 = scmp.lt.s32.totalorder %s11, 2
      // Predicated region
      $region17: #{bayesian_linear.1} parent=5 // pred_check
        %p227 = pneg %p226
      $region18: #{bayesian_linear.1} parent=5 // pred_check_branch
        %229 = sbr.rel (%p227) target = $region20
      $region19: #{bayesian_linear.1} parent=5 // pred_region
        // Predicated region
        $region21: #{bayesian_linear.1} parent=19 // pred_check
          %p230 = pneg %p80
        $region22: #{bayesian_linear.1} parent=19 // pred_check_branch
          %232 = sbr.rel (%p230) target = $region24
        $region23: #{bayesian_linear.1} parent=19 // pred_region
          %s233 = sand.u32 %s70, 1
          %s234 = sand.u32 %s70, 1
          %s235 = smul.addr %s234, 384
          %s236 = scalar_lea.vmem [#allocation2], %s235
          %s237 = smul.u32 48, %s20
          %s238 = smul.addr %s237, 2
          %s239 = sadd.s32 %s19, %s238
          %s240 = smul.addr %s239, 8
          %s241 = scalar_lea.vmem %s1, %s240
          // Predicated region
          $region25: #{bayesian_linear.1} parent=23 // pred_check
            _
          $region26: #{bayesian_linear.1} parent=23 // pred_check_branch
            %243 = sbr.rel (0) target = $region28
          $region27: #{bayesian_linear.1} parent=23 // pred_region
            // Predicated region
            $region29: #{bayesian_linear.1} parent=27 // pred_check
              _
            $region30: #{bayesian_linear.1} parent=27 // pred_check_branch
              %245 = sbr.rel (0) target = $region32
            $region31: #{bayesian_linear.1} parent=27 // pred_region
              // Predicated region
              $region44: #{bayesian_linear.1} parent=31 // pred_check
                _
              $region45: #{bayesian_linear.1} parent=31 // pred_check_branch
                %354 = sbr.rel (0) target = $region47
              $region46: #{bayesian_linear.1} parent=31 // pred_region
                loop: start=0, step=1, limit=1
                $region48: #{bayesian_linear.1} parent=46 // loop_pre_header
                  _
                $region49: #{bayesian_linear.1} parent=46 // loop_header
                  %s356 = sphi 0, %s360
                  %p357 = scmp.ge.s32.totalorder %s356, 1
                  %s361 = sphi %s241, %s241
                  %s362 = sphi %s236, %s236
                $region50: #{bayesian_linear.1} parent=46 // loop_header_branch
                  %359 = sbr.rel (%p357) target = $region54
                $region51: #{bayesian_linear.1} parent=46 // loop_body
                  %v363 = vld [vmem:[%s361] sm:$0xff]
                  %364 = vst [vmem:[%s362] sm:$0xff] %v363
                  %v365 = vld [vmem:[%s361 + $0x10] sm:$0xff]
                  %366 = vst [vmem:[%s362 + $0x8] sm:$0xff] %v365
                  %v367 = vld [vmem:[%s361 + $0x20] sm:$0xff]
                  %368 = vst [vmem:[%s362 + $0x10] sm:$0xff] %v367
                  %v369 = vld [vmem:[%s361 + $0x30] sm:$0xff]
                  %370 = vst [vmem:[%s362 + $0x18] sm:$0xff] %v369
                  %v371 = vld [vmem:[%s361 + $0x40] sm:$0xff]
                  %372 = vst [vmem:[%s362 + $0x20] sm:$0xff] %v371
                  %v373 = vld [vmem:[%s361 + $0x50] sm:$0xff]
                  %374 = vst [vmem:[%s362 + $0x28] sm:$0xff] %v373
                  %v375 = vld [vmem:[%s361 + $0x60] sm:$0xff]
                  %376 = vst [vmem:[%s362 + $0x30] sm:$0xff] %v375
                  %v377 = vld [vmem:[%s361 + $0x70] sm:$0xff]
                  %378 = vst [vmem:[%s362 + $0x38] sm:$0xff] %v377
                  %v379 = vld [vmem:[%s361 + $0x80] sm:$0xff]
                  %380 = vst [vmem:[%s362 + $0x40] sm:$0xff] %v379
                  %v381 = vld [vmem:[%s361 + $0x90] sm:$0xff]
                  %382 = vst [vmem:[%s362 + $0x48] sm:$0xff] %v381
                  %v383 = vld [vmem:[%s361 + $0xa0] sm:$0xff]
                  %384 = vst [vmem:[%s362 + $0x50] sm:$0xff] %v383
                  %v385 = vld [vmem:[%s361 + $0xb0] sm:$0xff]
                  %386 = vst [vmem:[%s362 + $0x58] sm:$0xff] %v385
                  %v387 = vld [vmem:[%s361 + $0xc0] sm:$0xff]
                  %388 = vst [vmem:[%s362 + $0x60] sm:$0xff] %v387
                  %v389 = vld [vmem:[%s361 + $0xd0] sm:$0xff]
                  %390 = vst [vmem:[%s362 + $0x68] sm:$0xff] %v389
                  %v391 = vld [vmem:[%s361 + $0xe0] sm:$0xff]
                  %392 = vst [vmem:[%s362 + $0x70] sm:$0xff] %v391
                  %v393 = vld [vmem:[%s361 + $0xf0] sm:$0xff]
                  %394 = vst [vmem:[%s362 + $0x78] sm:$0xff] %v393
                  %v395 = vld [vmem:[%s361 + $0x100] sm:$0xff]
                  %396 = vst [vmem:[%s362 + $0x80] sm:$0xff] %v395
                  %v397 = vld [vmem:[%s361 + $0x110] sm:$0xff]
                  %398 = vst [vmem:[%s362 + $0x88] sm:$0xff] %v397
                  %v399 = vld [vmem:[%s361 + $0x120] sm:$0xff]
                  %400 = vst [vmem:[%s362 + $0x90] sm:$0xff] %v399
                  %v401 = vld [vmem:[%s361 + $0x130] sm:$0xff]
                  %402 = vst [vmem:[%s362 + $0x98] sm:$0xff] %v401
                  %v403 = vld [vmem:[%s361 + $0x140] sm:$0xff]
                  %404 = vst [vmem:[%s362 + $0xa0] sm:$0xff] %v403
                  %v405 = vld [vmem:[%s361 + $0x150] sm:$0xff]
                  %406 = vst [vmem:[%s362 + $0xa8] sm:$0xff] %v405
                  %v407 = vld [vmem:[%s361 + $0x160] sm:$0xff]
                  %408 = vst [vmem:[%s362 + $0xb0] sm:$0xff] %v407
                  %v409 = vld [vmem:[%s361 + $0x170] sm:$0xff]
                  %410 = vst [vmem:[%s362 + $0xb8] sm:$0xff] %v409
                  %v411 = vld [vmem:[%s361 + $0x180] sm:$0xff]
                  %412 = vst [vmem:[%s362 + $0xc0] sm:$0xff] %v411
                  %v413 = vld [vmem:[%s361 + $0x190] sm:$0xff]
                  %414 = vst [vmem:[%s362 + $0xc8] sm:$0xff] %v413
                  %v415 = vld [vmem:[%s361 + $0x1a0] sm:$0xff]
                  %416 = vst [vmem:[%s362 + $0xd0] sm:$0xff] %v415
                  %v417 = vld [vmem:[%s361 + $0x1b0] sm:$0xff]
                  %418 = vst [vmem:[%s362 + $0xd8] sm:$0xff] %v417
                  %v419 = vld [vmem:[%s361 + $0x1c0] sm:$0xff]
                  %420 = vst [vmem:[%s362 + $0xe0] sm:$0xff] %v419
                  %v421 = vld [vmem:[%s361 + $0x1d0] sm:$0xff]
                  %422 = vst [vmem:[%s362 + $0xe8] sm:$0xff] %v421
                  %v423 = vld [vmem:[%s361 + $0x1e0] sm:$0xff]
                  %424 = vst [vmem:[%s362 + $0xf0] sm:$0xff] %v423
                  %v425 = vld [vmem:[%s361 + $0x1f0] sm:$0xff]
                  %426 = vst [vmem:[%s362 + $0xf8] sm:$0xff] %v425
                  %v427 = vld [vmem:[%s361 + $0x200] sm:$0xff]
                  %428 = vst [vmem:[%s362 + $0x100] sm:$0xff] %v427
                  %v429 = vld [vmem:[%s361 + $0x210] sm:$0xff]
                  %430 = vst [vmem:[%s362 + $0x108] sm:$0xff] %v429
                  %v431 = vld [vmem:[%s361 + $0x220] sm:$0xff]
                  %432 = vst [vmem:[%s362 + $0x110] sm:$0xff] %v431
                  %v433 = vld [vmem:[%s361 + $0x230] sm:$0xff]
                  %434 = vst [vmem:[%s362 + $0x118] sm:$0xff] %v433
                  %v435 = vld [vmem:[%s361 + $0x240] sm:$0xff]
                  %436 = vst [vmem:[%s362 + $0x120] sm:$0xff] %v435
                  %v437 = vld [vmem:[%s361 + $0x250] sm:$0xff]
                  %438 = vst [vmem:[%s362 + $0x128] sm:$0xff] %v437
                  %v439 = vld [vmem:[%s361 + $0x260] sm:$0xff]
                  %440 = vst [vmem:[%s362 + $0x130] sm:$0xff] %v439
                  %v441 = vld [vmem:[%s361 + $0x270] sm:$0xff]
                  %442 = vst [vmem:[%s362 + $0x138] sm:$0xff] %v441
                  %v443 = vld [vmem:[%s361 + $0x280] sm:$0xff]
                  %444 = vst [vmem:[%s362 + $0x140] sm:$0xff] %v443
                  %v445 = vld [vmem:[%s361 + $0x290] sm:$0xff]
                  %446 = vst [vmem:[%s362 + $0x148] sm:$0xff] %v445
                  %v447 = vld [vmem:[%s361 + $0x2a0] sm:$0xff]
                  %448 = vst [vmem:[%s362 + $0x150] sm:$0xff] %v447
                  %v449 = vld [vmem:[%s361 + $0x2b0] sm:$0xff]
                  %450 = vst [vmem:[%s362 + $0x158] sm:$0xff] %v449
                  %v451 = vld [vmem:[%s361 + $0x2c0] sm:$0xff]
                  %452 = vst [vmem:[%s362 + $0x160] sm:$0xff] %v451
                  %v453 = vld [vmem:[%s361 + $0x2d0] sm:$0xff]
                  %454 = vst [vmem:[%s362 + $0x168] sm:$0xff] %v453
                  %v455 = vld [vmem:[%s361 + $0x2e0] sm:$0xff]
                  %456 = vst [vmem:[%s362 + $0x170] sm:$0xff] %v455
                  %v457 = vld [vmem:[%s361 + $0x2f0] sm:$0xff]
                  %458 = vst [vmem:[%s362 + $0x178] sm:$0xff] %v457
                $region52: #{bayesian_linear.1} parent=46 // loop_footer
                  %s360 = sadd.s32 1, %s356
                $region53: #{bayesian_linear.1} parent=46 // loop_footer_branch
                  %355 = sbr.rel target = $region49
                $region54: #{bayesian_linear.1} parent=46 // loop_exit
                  _
              $region47: #{bayesian_linear.1} parent=31 // pred_fallthru
                _
              // Predicated region
              $region55: #{bayesian_linear.1} parent=31 // pred_check
                _
              $region56: #{bayesian_linear.1} parent=31 // pred_check_branch
                %460 = sbr.rel target = $region58
              $region57: #{bayesian_linear.1} parent=31 // pred_region
                _
              $region58: #{bayesian_linear.1} parent=31 // pred_fallthru
                _
            $region32: #{bayesian_linear.1} parent=27 // pred_fallthru
              _
            // Predicated region
            $region33: #{bayesian_linear.1} parent=27 // pred_check
              _
            $region34: #{bayesian_linear.1} parent=27 // pred_check_branch
              %247 = sbr.rel target = $region36
            $region35: #{bayesian_linear.1} parent=27 // pred_region
              loop: start=0, step=1, limit=1
              $region37: #{bayesian_linear.1} parent=35 // loop_pre_header
                _
              $region38: #{bayesian_linear.1} parent=35 // loop_header
                %s250 = sphi 0, %s254
                %p251 = scmp.ge.s32.totalorder %s250, 1
                %s255 = sphi %s241, %s241
                %s256 = sphi %s236, %s236
              $region39: #{bayesian_linear.1} parent=35 // loop_header_branch
                %253 = sbr.rel (%p251) target = $region43
              $region40: #{bayesian_linear.1} parent=35 // loop_body
                %v257 = vld [vmem:[%s255] sm:$0xff]
                %258 = vst [vmem:[%s256] sm:$0xff] %v257
                %v259 = vld [vmem:[%s255 + $0x10] sm:$0xff]
                %260 = vst [vmem:[%s256 + $0x8] sm:$0xff] %v259
                %v261 = vld [vmem:[%s255 + $0x20] sm:$0xff]
                %262 = vst [vmem:[%s256 + $0x10] sm:$0xff] %v261
                %v263 = vld [vmem:[%s255 + $0x30] sm:$0xff]
                %264 = vst [vmem:[%s256 + $0x18] sm:$0xff] %v263
                %v265 = vld [vmem:[%s255 + $0x40] sm:$0xff]
                %266 = vst [vmem:[%s256 + $0x20] sm:$0xff] %v265
                %v267 = vld [vmem:[%s255 + $0x50] sm:$0xff]
                %268 = vst [vmem:[%s256 + $0x28] sm:$0xff] %v267
                %v269 = vld [vmem:[%s255 + $0x60] sm:$0xff]
                %270 = vst [vmem:[%s256 + $0x30] sm:$0xff] %v269
                %v271 = vld [vmem:[%s255 + $0x70] sm:$0xff]
                %272 = vst [vmem:[%s256 + $0x38] sm:$0xff] %v271
                %v273 = vld [vmem:[%s255 + $0x80] sm:$0xff]
                %274 = vst [vmem:[%s256 + $0x40] sm:$0xff] %v273
                %v275 = vld [vmem:[%s255 + $0x90] sm:$0xff]
                %276 = vst [vmem:[%s256 + $0x48] sm:$0xff] %v275
                %v277 = vld [vmem:[%s255 + $0xa0] sm:$0xff]
                %278 = vst [vmem:[%s256 + $0x50] sm:$0xff] %v277
                %v279 = vld [vmem:[%s255 + $0xb0] sm:$0xff]
                %280 = vst [vmem:[%s256 + $0x58] sm:$0xff] %v279
                %v281 = vld [vmem:[%s255 + $0xc0] sm:$0xff]
                %282 = vst [vmem:[%s256 + $0x60] sm:$0xff] %v281
                %v283 = vld [vmem:[%s255 + $0xd0] sm:$0xff]
                %284 = vst [vmem:[%s256 + $0x68] sm:$0xff] %v283
                %v285 = vld [vmem:[%s255 + $0xe0] sm:$0xff]
                %286 = vst [vmem:[%s256 + $0x70] sm:$0xff] %v285
                %v287 = vld [vmem:[%s255 + $0xf0] sm:$0xff]
                %288 = vst [vmem:[%s256 + $0x78] sm:$0xff] %v287
                %v289 = vld [vmem:[%s255 + $0x100] sm:$0xff]
                %290 = vst [vmem:[%s256 + $0x80] sm:$0xff] %v289
                %v291 = vld [vmem:[%s255 + $0x110] sm:$0xff]
                %292 = vst [vmem:[%s256 + $0x88] sm:$0xff] %v291
                %v293 = vld [vmem:[%s255 + $0x120] sm:$0xff]
                %294 = vst [vmem:[%s256 + $0x90] sm:$0xff] %v293
                %v295 = vld [vmem:[%s255 + $0x130] sm:$0xff]
                %296 = vst [vmem:[%s256 + $0x98] sm:$0xff] %v295
                %v297 = vld [vmem:[%s255 + $0x140] sm:$0xff]
                %298 = vst [vmem:[%s256 + $0xa0] sm:$0xff] %v297
                %v299 = vld [vmem:[%s255 + $0x150] sm:$0xff]
                %300 = vst [vmem:[%s256 + $0xa8] sm:$0xff] %v299
                %v301 = vld [vmem:[%s255 + $0x160] sm:$0xff]
                %302 = vst [vmem:[%s256 + $0xb0] sm:$0xff] %v301
                %v303 = vld [vmem:[%s255 + $0x170] sm:$0xff]
                %304 = vst [vmem:[%s256 + $0xb8] sm:$0xff] %v303
                %v305 = vld [vmem:[%s255 + $0x180] sm:$0xff]
                %306 = vst [vmem:[%s256 + $0xc0] sm:$0xff] %v305
                %v307 = vld [vmem:[%s255 + $0x190] sm:$0xff]
                %308 = vst [vmem:[%s256 + $0xc8] sm:$0xff] %v307
                %v309 = vld [vmem:[%s255 + $0x1a0] sm:$0xff]
                %310 = vst [vmem:[%s256 + $0xd0] sm:$0xff] %v309
                %v311 = vld [vmem:[%s255 + $0x1b0] sm:$0xff]
                %312 = vst [vmem:[%s256 + $0xd8] sm:$0xff] %v311
                %v313 = vld [vmem:[%s255 + $0x1c0] sm:$0xff]
                %314 = vst [vmem:[%s256 + $0xe0] sm:$0xff] %v313
                %v315 = vld [vmem:[%s255 + $0x1d0] sm:$0xff]
                %316 = vst [vmem:[%s256 + $0xe8] sm:$0xff] %v315
                %v317 = vld [vmem:[%s255 + $0x1e0] sm:$0xff]
                %318 = vst [vmem:[%s256 + $0xf0] sm:$0xff] %v317
                %v319 = vld [vmem:[%s255 + $0x1f0] sm:$0xff]
                %320 = vst [vmem:[%s256 + $0xf8] sm:$0xff] %v319
                %v321 = vld [vmem:[%s255 + $0x200] sm:$0xff]
                %322 = vst [vmem:[%s256 + $0x100] sm:$0xff] %v321
                %v323 = vld [vmem:[%s255 + $0x210] sm:$0xff]
                %324 = vst [vmem:[%s256 + $0x108] sm:$0xff] %v323
                %v325 = vld [vmem:[%s255 + $0x220] sm:$0xff]
                %326 = vst [vmem:[%s256 + $0x110] sm:$0xff] %v325
                %v327 = vld [vmem:[%s255 + $0x230] sm:$0xff]
                %328 = vst [vmem:[%s256 + $0x118] sm:$0xff] %v327
                %v329 = vld [vmem:[%s255 + $0x240] sm:$0xff]
                %330 = vst [vmem:[%s256 + $0x120] sm:$0xff] %v329
                %v331 = vld [vmem:[%s255 + $0x250] sm:$0xff]
                %332 = vst [vmem:[%s256 + $0x128] sm:$0xff] %v331
                %v333 = vld [vmem:[%s255 + $0x260] sm:$0xff]
                %334 = vst [vmem:[%s256 + $0x130] sm:$0xff] %v333
                %v335 = vld [vmem:[%s255 + $0x270] sm:$0xff]
                %336 = vst [vmem:[%s256 + $0x138] sm:$0xff] %v335
                %v337 = vld [vmem:[%s255 + $0x280] sm:$0xff]
                %338 = vst [vmem:[%s256 + $0x140] sm:$0xff] %v337
                %v339 = vld [vmem:[%s255 + $0x290] sm:$0xff]
                %340 = vst [vmem:[%s256 + $0x148] sm:$0xff] %v339
                %v341 = vld [vmem:[%s255 + $0x2a0] sm:$0xff]
                %342 = vst [vmem:[%s256 + $0x150] sm:$0xff] %v341
                %v343 = vld [vmem:[%s255 + $0x2b0] sm:$0xff]
                %344 = vst [vmem:[%s256 + $0x158] sm:$0xff] %v343
                %v345 = vld [vmem:[%s255 + $0x2c0] sm:$0xff]
                %346 = vst [vmem:[%s256 + $0x160] sm:$0xff] %v345
                %v347 = vld [vmem:[%s255 + $0x2d0] sm:$0xff]
                %348 = vst [vmem:[%s256 + $0x168] sm:$0xff] %v347
                %v349 = vld [vmem:[%s255 + $0x2e0] sm:$0xff]
                %350 = vst [vmem:[%s256 + $0x170] sm:$0xff] %v349
                %v351 = vld [vmem:[%s255 + $0x2f0] sm:$0xff]
                %352 = vst [vmem:[%s256 + $0x178] sm:$0xff] %v351
              $region41: #{bayesian_linear.1} parent=35 // loop_footer
                %s254 = sadd.s32 1, %s250
              $region42: #{bayesian_linear.1} parent=35 // loop_footer_branch
                %249 = sbr.rel target = $region38
              $region43: #{bayesian_linear.1} parent=35 // loop_exit
                _
            $region36: #{bayesian_linear.1} parent=27 // pred_fallthru
              _
          $region28: #{bayesian_linear.1} parent=23 // pred_fallthru
            _
          %461 = vnop
        $region24: #{bayesian_linear.1} parent=19 // pred_fallthru
          _
        // Predicated region
        $region59: #{bayesian_linear.1} parent=19 // pred_check
          %p462 = pneg %p108
        $region60: #{bayesian_linear.1} parent=19 // pred_check_branch
          %464 = sbr.rel (%p462) target = $region62
        $region61: #{bayesian_linear.1} parent=19 // pred_region
          %s465 = sand.u32 %s98, 1
          %s466 = sand.u32 %s98, 1
          %s467 = smul.addr %s466, 384
          %s468 = scalar_lea.vmem [#allocation3], %s467
          %s469 = smul.u32 48, %s20
          %s470 = smul.addr %s469, 2
          %s471 = sadd.s32 %s19, %s470
          %s472 = smul.addr %s471, 8
          %s473 = scalar_lea.vmem %s2, %s472
          // Predicated region
          $region63: #{bayesian_linear.1} parent=61 // pred_check
            _
          $region64: #{bayesian_linear.1} parent=61 // pred_check_branch
            %475 = sbr.rel (0) target = $region66
          $region65: #{bayesian_linear.1} parent=61 // pred_region
            // Predicated region
            $region67: #{bayesian_linear.1} parent=65 // pred_check
              _
            $region68: #{bayesian_linear.1} parent=65 // pred_check_branch
              %477 = sbr.rel (0) target = $region70
            $region69: #{bayesian_linear.1} parent=65 // pred_region
              // Predicated region
              $region82: #{bayesian_linear.1} parent=69 // pred_check
                _
              $region83: #{bayesian_linear.1} parent=69 // pred_check_branch
                %586 = sbr.rel (0) target = $region85
              $region84: #{bayesian_linear.1} parent=69 // pred_region
                loop: start=0, step=1, limit=1
                $region86: #{bayesian_linear.1} parent=84 // loop_pre_header
                  _
                $region87: #{bayesian_linear.1} parent=84 // loop_header
                  %s588 = sphi 0, %s592
                  %p589 = scmp.ge.s32.totalorder %s588, 1
                  %s593 = sphi %s473, %s473
                  %s594 = sphi %s468, %s468
                $region88: #{bayesian_linear.1} parent=84 // loop_header_branch
                  %591 = sbr.rel (%p589) target = $region92
                $region89: #{bayesian_linear.1} parent=84 // loop_body
                  %v595 = vld [vmem:[%s593] sm:$0xff]
                  %596 = vst [vmem:[%s594] sm:$0xff] %v595
                  %v597 = vld [vmem:[%s593 + $0x10] sm:$0xff]
                  %598 = vst [vmem:[%s594 + $0x8] sm:$0xff] %v597
                  %v599 = vld [vmem:[%s593 + $0x20] sm:$0xff]
                  %600 = vst [vmem:[%s594 + $0x10] sm:$0xff] %v599
                  %v601 = vld [vmem:[%s593 + $0x30] sm:$0xff]
                  %602 = vst [vmem:[%s594 + $0x18] sm:$0xff] %v601
                  %v603 = vld [vmem:[%s593 + $0x40] sm:$0xff]
                  %604 = vst [vmem:[%s594 + $0x20] sm:$0xff] %v603
                  %v605 = vld [vmem:[%s593 + $0x50] sm:$0xff]
                  %606 = vst [vmem:[%s594 + $0x28] sm:$0xff] %v605
                  %v607 = vld [vmem:[%s593 + $0x60] sm:$0xff]
                  %608 = vst [vmem:[%s594 + $0x30] sm:$0xff] %v607
                  %v609 = vld [vmem:[%s593 + $0x70] sm:$0xff]
                  %610 = vst [vmem:[%s594 + $0x38] sm:$0xff] %v609
                  %v611 = vld [vmem:[%s593 + $0x80] sm:$0xff]
                  %612 = vst [vmem:[%s594 + $0x40] sm:$0xff] %v611
                  %v613 = vld [vmem:[%s593 + $0x90] sm:$0xff]
                  %614 = vst [vmem:[%s594 + $0x48] sm:$0xff] %v613
                  %v615 = vld [vmem:[%s593 + $0xa0] sm:$0xff]
                  %616 = vst [vmem:[%s594 + $0x50] sm:$0xff] %v615
                  %v617 = vld [vmem:[%s593 + $0xb0] sm:$0xff]
                  %618 = vst [vmem:[%s594 + $0x58] sm:$0xff] %v617
                  %v619 = vld [vmem:[%s593 + $0xc0] sm:$0xff]
                  %620 = vst [vmem:[%s594 + $0x60] sm:$0xff] %v619
                  %v621 = vld [vmem:[%s593 + $0xd0] sm:$0xff]
                  %622 = vst [vmem:[%s594 + $0x68] sm:$0xff] %v621
                  %v623 = vld [vmem:[%s593 + $0xe0] sm:$0xff]
                  %624 = vst [vmem:[%s594 + $0x70] sm:$0xff] %v623
                  %v625 = vld [vmem:[%s593 + $0xf0] sm:$0xff]
                  %626 = vst [vmem:[%s594 + $0x78] sm:$0xff] %v625
                  %v627 = vld [vmem:[%s593 + $0x100] sm:$0xff]
                  %628 = vst [vmem:[%s594 + $0x80] sm:$0xff] %v627
                  %v629 = vld [vmem:[%s593 + $0x110] sm:$0xff]
                  %630 = vst [vmem:[%s594 + $0x88] sm:$0xff] %v629
                  %v631 = vld [vmem:[%s593 + $0x120] sm:$0xff]
                  %632 = vst [vmem:[%s594 + $0x90] sm:$0xff] %v631
                  %v633 = vld [vmem:[%s593 + $0x130] sm:$0xff]
                  %634 = vst [vmem:[%s594 + $0x98] sm:$0xff] %v633
                  %v635 = vld [vmem:[%s593 + $0x140] sm:$0xff]
                  %636 = vst [vmem:[%s594 + $0xa0] sm:$0xff] %v635
                  %v637 = vld [vmem:[%s593 + $0x150] sm:$0xff]
                  %638 = vst [vmem:[%s594 + $0xa8] sm:$0xff] %v637
                  %v639 = vld [vmem:[%s593 + $0x160] sm:$0xff]
                  %640 = vst [vmem:[%s594 + $0xb0] sm:$0xff] %v639
                  %v641 = vld [vmem:[%s593 + $0x170] sm:$0xff]
                  %642 = vst [vmem:[%s594 + $0xb8] sm:$0xff] %v641
                  %v643 = vld [vmem:[%s593 + $0x180] sm:$0xff]
                  %644 = vst [vmem:[%s594 + $0xc0] sm:$0xff] %v643
                  %v645 = vld [vmem:[%s593 + $0x190] sm:$0xff]
                  %646 = vst [vmem:[%s594 + $0xc8] sm:$0xff] %v645
                  %v647 = vld [vmem:[%s593 + $0x1a0] sm:$0xff]
                  %648 = vst [vmem:[%s594 + $0xd0] sm:$0xff] %v647
                  %v649 = vld [vmem:[%s593 + $0x1b0] sm:$0xff]
                  %650 = vst [vmem:[%s594 + $0xd8] sm:$0xff] %v649
                  %v651 = vld [vmem:[%s593 + $0x1c0] sm:$0xff]
                  %652 = vst [vmem:[%s594 + $0xe0] sm:$0xff] %v651
                  %v653 = vld [vmem:[%s593 + $0x1d0] sm:$0xff]
                  %654 = vst [vmem:[%s594 + $0xe8] sm:$0xff] %v653
                  %v655 = vld [vmem:[%s593 + $0x1e0] sm:$0xff]
                  %656 = vst [vmem:[%s594 + $0xf0] sm:$0xff] %v655
                  %v657 = vld [vmem:[%s593 + $0x1f0] sm:$0xff]
                  %658 = vst [vmem:[%s594 + $0xf8] sm:$0xff] %v657
                  %v659 = vld [vmem:[%s593 + $0x200] sm:$0xff]
                  %660 = vst [vmem:[%s594 + $0x100] sm:$0xff] %v659
                  %v661 = vld [vmem:[%s593 + $0x210] sm:$0xff]
                  %662 = vst [vmem:[%s594 + $0x108] sm:$0xff] %v661
                  %v663 = vld [vmem:[%s593 + $0x220] sm:$0xff]
                  %664 = vst [vmem:[%s594 + $0x110] sm:$0xff] %v663
                  %v665 = vld [vmem:[%s593 + $0x230] sm:$0xff]
                  %666 = vst [vmem:[%s594 + $0x118] sm:$0xff] %v665
                  %v667 = vld [vmem:[%s593 + $0x240] sm:$0xff]
                  %668 = vst [vmem:[%s594 + $0x120] sm:$0xff] %v667
                  %v669 = vld [vmem:[%s593 + $0x250] sm:$0xff]
                  %670 = vst [vmem:[%s594 + $0x128] sm:$0xff] %v669
                  %v671 = vld [vmem:[%s593 + $0x260] sm:$0xff]
                  %672 = vst [vmem:[%s594 + $0x130] sm:$0xff] %v671
                  %v673 = vld [vmem:[%s593 + $0x270] sm:$0xff]
                  %674 = vst [vmem:[%s594 + $0x138] sm:$0xff] %v673
                  %v675 = vld [vmem:[%s593 + $0x280] sm:$0xff]
                  %676 = vst [vmem:[%s594 + $0x140] sm:$0xff] %v675
                  %v677 = vld [vmem:[%s593 + $0x290] sm:$0xff]
                  %678 = vst [vmem:[%s594 + $0x148] sm:$0xff] %v677
                  %v679 = vld [vmem:[%s593 + $0x2a0] sm:$0xff]
                  %680 = vst [vmem:[%s594 + $0x150] sm:$0xff] %v679
                  %v681 = vld [vmem:[%s593 + $0x2b0] sm:$0xff]
                  %682 = vst [vmem:[%s594 + $0x158] sm:$0xff] %v681
                  %v683 = vld [vmem:[%s593 + $0x2c0] sm:$0xff]
                  %684 = vst [vmem:[%s594 + $0x160] sm:$0xff] %v683
                  %v685 = vld [vmem:[%s593 + $0x2d0] sm:$0xff]
                  %686 = vst [vmem:[%s594 + $0x168] sm:$0xff] %v685
                  %v687 = vld [vmem:[%s593 + $0x2e0] sm:$0xff]
                  %688 = vst [vmem:[%s594 + $0x170] sm:$0xff] %v687
                  %v689 = vld [vmem:[%s593 + $0x2f0] sm:$0xff]
                  %690 = vst [vmem:[%s594 + $0x178] sm:$0xff] %v689
                $region90: #{bayesian_linear.1} parent=84 // loop_footer
                  %s592 = sadd.s32 1, %s588
                $region91: #{bayesian_linear.1} parent=84 // loop_footer_branch
                  %587 = sbr.rel target = $region87
                $region92: #{bayesian_linear.1} parent=84 // loop_exit
                  _
              $region85: #{bayesian_linear.1} parent=69 // pred_fallthru
                _
              // Predicated region
              $region93: #{bayesian_linear.1} parent=69 // pred_check
                _
              $region94: #{bayesian_linear.1} parent=69 // pred_check_branch
                %692 = sbr.rel target = $region96
              $region95: #{bayesian_linear.1} parent=69 // pred_region
                _
              $region96: #{bayesian_linear.1} parent=69 // pred_fallthru
                _
            $region70: #{bayesian_linear.1} parent=65 // pred_fallthru
              _
            // Predicated region
            $region71: #{bayesian_linear.1} parent=65 // pred_check
              _
            $region72: #{bayesian_linear.1} parent=65 // pred_check_branch
              %479 = sbr.rel target = $region74
            $region73: #{bayesian_linear.1} parent=65 // pred_region
              loop: start=0, step=1, limit=1
              $region75: #{bayesian_linear.1} parent=73 // loop_pre_header
                _
              $region76: #{bayesian_linear.1} parent=73 // loop_header
                %s482 = sphi 0, %s486
                %p483 = scmp.ge.s32.totalorder %s482, 1
                %s487 = sphi %s473, %s473
                %s488 = sphi %s468, %s468
              $region77: #{bayesian_linear.1} parent=73 // loop_header_branch
                %485 = sbr.rel (%p483) target = $region81
              $region78: #{bayesian_linear.1} parent=73 // loop_body
                %v489 = vld [vmem:[%s487] sm:$0xff]
                %490 = vst [vmem:[%s488] sm:$0xff] %v489
                %v491 = vld [vmem:[%s487 + $0x10] sm:$0xff]
                %492 = vst [vmem:[%s488 + $0x8] sm:$0xff] %v491
                %v493 = vld [vmem:[%s487 + $0x20] sm:$0xff]
                %494 = vst [vmem:[%s488 + $0x10] sm:$0xff] %v493
                %v495 = vld [vmem:[%s487 + $0x30] sm:$0xff]
                %496 = vst [vmem:[%s488 + $0x18] sm:$0xff] %v495
                %v497 = vld [vmem:[%s487 + $0x40] sm:$0xff]
                %498 = vst [vmem:[%s488 + $0x20] sm:$0xff] %v497
                %v499 = vld [vmem:[%s487 + $0x50] sm:$0xff]
                %500 = vst [vmem:[%s488 + $0x28] sm:$0xff] %v499
                %v501 = vld [vmem:[%s487 + $0x60] sm:$0xff]
                %502 = vst [vmem:[%s488 + $0x30] sm:$0xff] %v501
                %v503 = vld [vmem:[%s487 + $0x70] sm:$0xff]
                %504 = vst [vmem:[%s488 + $0x38] sm:$0xff] %v503
                %v505 = vld [vmem:[%s487 + $0x80] sm:$0xff]
                %506 = vst [vmem:[%s488 + $0x40] sm:$0xff] %v505
                %v507 = vld [vmem:[%s487 + $0x90] sm:$0xff]
                %508 = vst [vmem:[%s488 + $0x48] sm:$0xff] %v507
                %v509 = vld [vmem:[%s487 + $0xa0] sm:$0xff]
                %510 = vst [vmem:[%s488 + $0x50] sm:$0xff] %v509
                %v511 = vld [vmem:[%s487 + $0xb0] sm:$0xff]
                %512 = vst [vmem:[%s488 + $0x58] sm:$0xff] %v511
                %v513 = vld [vmem:[%s487 + $0xc0] sm:$0xff]
                %514 = vst [vmem:[%s488 + $0x60] sm:$0xff] %v513
                %v515 = vld [vmem:[%s487 + $0xd0] sm:$0xff]
                %516 = vst [vmem:[%s488 + $0x68] sm:$0xff] %v515
                %v517 = vld [vmem:[%s487 + $0xe0] sm:$0xff]
                %518 = vst [vmem:[%s488 + $0x70] sm:$0xff] %v517
                %v519 = vld [vmem:[%s487 + $0xf0] sm:$0xff]
                %520 = vst [vmem:[%s488 + $0x78] sm:$0xff] %v519
                %v521 = vld [vmem:[%s487 + $0x100] sm:$0xff]
                %522 = vst [vmem:[%s488 + $0x80] sm:$0xff] %v521
                %v523 = vld [vmem:[%s487 + $0x110] sm:$0xff]
                %524 = vst [vmem:[%s488 + $0x88] sm:$0xff] %v523
                %v525 = vld [vmem:[%s487 + $0x120] sm:$0xff]
                %526 = vst [vmem:[%s488 + $0x90] sm:$0xff] %v525
                %v527 = vld [vmem:[%s487 + $0x130] sm:$0xff]
                %528 = vst [vmem:[%s488 + $0x98] sm:$0xff] %v527
                %v529 = vld [vmem:[%s487 + $0x140] sm:$0xff]
                %530 = vst [vmem:[%s488 + $0xa0] sm:$0xff] %v529
                %v531 = vld [vmem:[%s487 + $0x150] sm:$0xff]
                %532 = vst [vmem:[%s488 + $0xa8] sm:$0xff] %v531
                %v533 = vld [vmem:[%s487 + $0x160] sm:$0xff]
                %534 = vst [vmem:[%s488 + $0xb0] sm:$0xff] %v533
                %v535 = vld [vmem:[%s487 + $0x170] sm:$0xff]
                %536 = vst [vmem:[%s488 + $0xb8] sm:$0xff] %v535
                %v537 = vld [vmem:[%s487 + $0x180] sm:$0xff]
                %538 = vst [vmem:[%s488 + $0xc0] sm:$0xff] %v537
                %v539 = vld [vmem:[%s487 + $0x190] sm:$0xff]
                %540 = vst [vmem:[%s488 + $0xc8] sm:$0xff] %v539
                %v541 = vld [vmem:[%s487 + $0x1a0] sm:$0xff]
                %542 = vst [vmem:[%s488 + $0xd0] sm:$0xff] %v541
                %v543 = vld [vmem:[%s487 + $0x1b0] sm:$0xff]
                %544 = vst [vmem:[%s488 + $0xd8] sm:$0xff] %v543
                %v545 = vld [vmem:[%s487 + $0x1c0] sm:$0xff]
                %546 = vst [vmem:[%s488 + $0xe0] sm:$0xff] %v545
                %v547 = vld [vmem:[%s487 + $0x1d0] sm:$0xff]
                %548 = vst [vmem:[%s488 + $0xe8] sm:$0xff] %v547
                %v549 = vld [vmem:[%s487 + $0x1e0] sm:$0xff]
                %550 = vst [vmem:[%s488 + $0xf0] sm:$0xff] %v549
                %v551 = vld [vmem:[%s487 + $0x1f0] sm:$0xff]
                %552 = vst [vmem:[%s488 + $0xf8] sm:$0xff] %v551
                %v553 = vld [vmem:[%s487 + $0x200] sm:$0xff]
                %554 = vst [vmem:[%s488 + $0x100] sm:$0xff] %v553
                %v555 = vld [vmem:[%s487 + $0x210] sm:$0xff]
                %556 = vst [vmem:[%s488 + $0x108] sm:$0xff] %v555
                %v557 = vld [vmem:[%s487 + $0x220] sm:$0xff]
                %558 = vst [vmem:[%s488 + $0x110] sm:$0xff] %v557
                %v559 = vld [vmem:[%s487 + $0x230] sm:$0xff]
                %560 = vst [vmem:[%s488 + $0x118] sm:$0xff] %v559
                %v561 = vld [vmem:[%s487 + $0x240] sm:$0xff]
                %562 = vst [vmem:[%s488 + $0x120] sm:$0xff] %v561
                %v563 = vld [vmem:[%s487 + $0x250] sm:$0xff]
                %564 = vst [vmem:[%s488 + $0x128] sm:$0xff] %v563
                %v565 = vld [vmem:[%s487 + $0x260] sm:$0xff]
                %566 = vst [vmem:[%s488 + $0x130] sm:$0xff] %v565
                %v567 = vld [vmem:[%s487 + $0x270] sm:$0xff]
                %568 = vst [vmem:[%s488 + $0x138] sm:$0xff] %v567
                %v569 = vld [vmem:[%s487 + $0x280] sm:$0xff]
                %570 = vst [vmem:[%s488 + $0x140] sm:$0xff] %v569
                %v571 = vld [vmem:[%s487 + $0x290] sm:$0xff]
                %572 = vst [vmem:[%s488 + $0x148] sm:$0xff] %v571
                %v573 = vld [vmem:[%s487 + $0x2a0] sm:$0xff]
                %574 = vst [vmem:[%s488 + $0x150] sm:$0xff] %v573
                %v575 = vld [vmem:[%s487 + $0x2b0] sm:$0xff]
                %576 = vst [vmem:[%s488 + $0x158] sm:$0xff] %v575
                %v577 = vld [vmem:[%s487 + $0x2c0] sm:$0xff]
                %578 = vst [vmem:[%s488 + $0x160] sm:$0xff] %v577
                %v579 = vld [vmem:[%s487 + $0x2d0] sm:$0xff]
                %580 = vst [vmem:[%s488 + $0x168] sm:$0xff] %v579
                %v581 = vld [vmem:[%s487 + $0x2e0] sm:$0xff]
                %582 = vst [vmem:[%s488 + $0x170] sm:$0xff] %v581
                %v583 = vld [vmem:[%s487 + $0x2f0] sm:$0xff]
                %584 = vst [vmem:[%s488 + $0x178] sm:$0xff] %v583
              $region79: #{bayesian_linear.1} parent=73 // loop_footer
                %s486 = sadd.s32 1, %s482
              $region80: #{bayesian_linear.1} parent=73 // loop_footer_branch
                %481 = sbr.rel target = $region76
              $region81: #{bayesian_linear.1} parent=73 // loop_exit
                _
            $region74: #{bayesian_linear.1} parent=65 // pred_fallthru
              _
          $region66: #{bayesian_linear.1} parent=61 // pred_fallthru
            _
          %693 = vnop
        $region62: #{bayesian_linear.1} parent=19 // pred_fallthru
          _
        // Predicated region
        $region97: #{bayesian_linear.1} parent=19 // pred_check
          %p694 = pneg %p136
        $region98: #{bayesian_linear.1} parent=19 // pred_check_branch
          %696 = sbr.rel (%p694) target = $region100
        $region99: #{bayesian_linear.1} parent=19 // pred_region
          %s697 = sand.u32 %s126, 1
          %s698 = sand.u32 %s126, 1
          %s699 = smul.addr %s698, 192
          %s700 = scalar_lea.vmem [#allocation4], %s699
          %s701 = smul.u32 48, %s20
          %s702 = smul.addr %s701, 2
          %s703 = sadd.s32 %s19, %s702
          %s704 = smul.addr %s703, 4
          %s705 = scalar_lea.vmem %s3, %s704
          // Predicated region
          $region101: #{bayesian_linear.1} parent=99 // pred_check
            _
          $region102: #{bayesian_linear.1} parent=99 // pred_check_branch
            %707 = sbr.rel (0) target = $region104
          $region103: #{bayesian_linear.1} parent=99 // pred_region
            // Predicated region
            $region105: #{bayesian_linear.1} parent=103 // pred_check
              _
            $region106: #{bayesian_linear.1} parent=103 // pred_check_branch
              %709 = sbr.rel target = $region108
            $region107: #{bayesian_linear.1} parent=103 // pred_region
              // Predicated region
              $region120: #{bayesian_linear.1} parent=107 // pred_check
                _
              $region121: #{bayesian_linear.1} parent=107 // pred_check_branch
                %818 = sbr.rel (0) target = $region123
              $region122: #{bayesian_linear.1} parent=107 // pred_region
                loop: start=0, step=1, limit=1
                $region124: #{bayesian_linear.1} parent=122 // loop_pre_header
                  _
                $region125: #{bayesian_linear.1} parent=122 // loop_header
                  %s820 = sphi 0, %s824
                  %p821 = scmp.ge.s32.totalorder %s820, 1
                  %s825 = sphi %s705, %s705
                  %s826 = sphi %s700, %s700
                $region126: #{bayesian_linear.1} parent=122 // loop_header_branch
                  %823 = sbr.rel (%p821) target = $region130
                $region127: #{bayesian_linear.1} parent=122 // loop_body
                  _
                $region128: #{bayesian_linear.1} parent=122 // loop_footer
                  %s824 = sadd.s32 1, %s820
                $region129: #{bayesian_linear.1} parent=122 // loop_footer_branch
                  %819 = sbr.rel target = $region125
                $region130: #{bayesian_linear.1} parent=122 // loop_exit
                  _
                loop: start=0, step=1, limit=1
                $region131: #{bayesian_linear.1} parent=122 // loop_pre_header
                  _
                $region132: #{bayesian_linear.1} parent=122 // loop_header
                  %s829 = sphi 0, %s833
                  %p830 = scmp.ge.s32.totalorder %s829, 1
                  %s834 = sphi %s705, %s705
                  %s835 = sphi %s700, %s700
                $region133: #{bayesian_linear.1} parent=122 // loop_header_branch
                  %832 = sbr.rel (%p830) target = $region137
                $region134: #{bayesian_linear.1} parent=122 // loop_body
                  %v836 = vld [vmem:[%s834] sm:$0xf]
                  %837 = vst [vmem:[%s835] sm:$0xf] %v836
                  %v838 = vld [vmem:[%s834 + $0x8] sm:$0xf]
                  %839 = vst [vmem:[%s835 + $0x4] sm:$0xf] %v838
                  %v840 = vld [vmem:[%s834 + $0x10] sm:$0xf]
                  %841 = vst [vmem:[%s835 + $0x8] sm:$0xf] %v840
                  %v842 = vld [vmem:[%s834 + $0x18] sm:$0xf]
                  %843 = vst [vmem:[%s835 + $0xc] sm:$0xf] %v842
                  %v844 = vld [vmem:[%s834 + $0x20] sm:$0xf]
                  %845 = vst [vmem:[%s835 + $0x10] sm:$0xf] %v844
                  %v846 = vld [vmem:[%s834 + $0x28] sm:$0xf]
                  %847 = vst [vmem:[%s835 + $0x14] sm:$0xf] %v846
                  %v848 = vld [vmem:[%s834 + $0x30] sm:$0xf]
                  %849 = vst [vmem:[%s835 + $0x18] sm:$0xf] %v848
                  %v850 = vld [vmem:[%s834 + $0x38] sm:$0xf]
                  %851 = vst [vmem:[%s835 + $0x1c] sm:$0xf] %v850
                  %v852 = vld [vmem:[%s834 + $0x40] sm:$0xf]
                  %853 = vst [vmem:[%s835 + $0x20] sm:$0xf] %v852
                  %v854 = vld [vmem:[%s834 + $0x48] sm:$0xf]
                  %855 = vst [vmem:[%s835 + $0x24] sm:$0xf] %v854
                  %v856 = vld [vmem:[%s834 + $0x50] sm:$0xf]
                  %857 = vst [vmem:[%s835 + $0x28] sm:$0xf] %v856
                  %v858 = vld [vmem:[%s834 + $0x58] sm:$0xf]
                  %859 = vst [vmem:[%s835 + $0x2c] sm:$0xf] %v858
                  %v860 = vld [vmem:[%s834 + $0x60] sm:$0xf]
                  %861 = vst [vmem:[%s835 + $0x30] sm:$0xf] %v860
                  %v862 = vld [vmem:[%s834 + $0x68] sm:$0xf]
                  %863 = vst [vmem:[%s835 + $0x34] sm:$0xf] %v862
                  %v864 = vld [vmem:[%s834 + $0x70] sm:$0xf]
                  %865 = vst [vmem:[%s835 + $0x38] sm:$0xf] %v864
                  %v866 = vld [vmem:[%s834 + $0x78] sm:$0xf]
                  %867 = vst [vmem:[%s835 + $0x3c] sm:$0xf] %v866
                  %v868 = vld [vmem:[%s834 + $0x80] sm:$0xf]
                  %869 = vst [vmem:[%s835 + $0x40] sm:$0xf] %v868
                  %v870 = vld [vmem:[%s834 + $0x88] sm:$0xf]
                  %871 = vst [vmem:[%s835 + $0x44] sm:$0xf] %v870
                  %v872 = vld [vmem:[%s834 + $0x90] sm:$0xf]
                  %873 = vst [vmem:[%s835 + $0x48] sm:$0xf] %v872
                  %v874 = vld [vmem:[%s834 + $0x98] sm:$0xf]
                  %875 = vst [vmem:[%s835 + $0x4c] sm:$0xf] %v874
                  %v876 = vld [vmem:[%s834 + $0xa0] sm:$0xf]
                  %877 = vst [vmem:[%s835 + $0x50] sm:$0xf] %v876
                  %v878 = vld [vmem:[%s834 + $0xa8] sm:$0xf]
                  %879 = vst [vmem:[%s835 + $0x54] sm:$0xf] %v878
                  %v880 = vld [vmem:[%s834 + $0xb0] sm:$0xf]
                  %881 = vst [vmem:[%s835 + $0x58] sm:$0xf] %v880
                  %v882 = vld [vmem:[%s834 + $0xb8] sm:$0xf]
                  %883 = vst [vmem:[%s835 + $0x5c] sm:$0xf] %v882
                  %v884 = vld [vmem:[%s834 + $0xc0] sm:$0xf]
                  %885 = vst [vmem:[%s835 + $0x60] sm:$0xf] %v884
                  %v886 = vld [vmem:[%s834 + $0xc8] sm:$0xf]
                  %887 = vst [vmem:[%s835 + $0x64] sm:$0xf] %v886
                  %v888 = vld [vmem:[%s834 + $0xd0] sm:$0xf]
                  %889 = vst [vmem:[%s835 + $0x68] sm:$0xf] %v888
                  %v890 = vld [vmem:[%s834 + $0xd8] sm:$0xf]
                  %891 = vst [vmem:[%s835 + $0x6c] sm:$0xf] %v890
                  %v892 = vld [vmem:[%s834 + $0xe0] sm:$0xf]
                  %893 = vst [vmem:[%s835 + $0x70] sm:$0xf] %v892
                  %v894 = vld [vmem:[%s834 + $0xe8] sm:$0xf]
                  %895 = vst [vmem:[%s835 + $0x74] sm:$0xf] %v894
                  %v896 = vld [vmem:[%s834 + $0xf0] sm:$0xf]
                  %897 = vst [vmem:[%s835 + $0x78] sm:$0xf] %v896
                  %v898 = vld [vmem:[%s834 + $0xf8] sm:$0xf]
                  %899 = vst [vmem:[%s835 + $0x7c] sm:$0xf] %v898
                  %v900 = vld [vmem:[%s834 + $0x100] sm:$0xf]
                  %901 = vst [vmem:[%s835 + $0x80] sm:$0xf] %v900
                  %v902 = vld [vmem:[%s834 + $0x108] sm:$0xf]
                  %903 = vst [vmem:[%s835 + $0x84] sm:$0xf] %v902
                  %v904 = vld [vmem:[%s834 + $0x110] sm:$0xf]
                  %905 = vst [vmem:[%s835 + $0x88] sm:$0xf] %v904
                  %v906 = vld [vmem:[%s834 + $0x118] sm:$0xf]
                  %907 = vst [vmem:[%s835 + $0x8c] sm:$0xf] %v906
                  %v908 = vld [vmem:[%s834 + $0x120] sm:$0xf]
                  %909 = vst [vmem:[%s835 + $0x90] sm:$0xf] %v908
                  %v910 = vld [vmem:[%s834 + $0x128] sm:$0xf]
                  %911 = vst [vmem:[%s835 + $0x94] sm:$0xf] %v910
                  %v912 = vld [vmem:[%s834 + $0x130] sm:$0xf]
                  %913 = vst [vmem:[%s835 + $0x98] sm:$0xf] %v912
                  %v914 = vld [vmem:[%s834 + $0x138] sm:$0xf]
                  %915 = vst [vmem:[%s835 + $0x9c] sm:$0xf] %v914
                  %v916 = vld [vmem:[%s834 + $0x140] sm:$0xf]
                  %917 = vst [vmem:[%s835 + $0xa0] sm:$0xf] %v916
                  %v918 = vld [vmem:[%s834 + $0x148] sm:$0xf]
                  %919 = vst [vmem:[%s835 + $0xa4] sm:$0xf] %v918
                  %v920 = vld [vmem:[%s834 + $0x150] sm:$0xf]
                  %921 = vst [vmem:[%s835 + $0xa8] sm:$0xf] %v920
                  %v922 = vld [vmem:[%s834 + $0x158] sm:$0xf]
                  %923 = vst [vmem:[%s835 + $0xac] sm:$0xf] %v922
                  %v924 = vld [vmem:[%s834 + $0x160] sm:$0xf]
                  %925 = vst [vmem:[%s835 + $0xb0] sm:$0xf] %v924
                  %v926 = vld [vmem:[%s834 + $0x168] sm:$0xf]
                  %927 = vst [vmem:[%s835 + $0xb4] sm:$0xf] %v926
                  %v928 = vld [vmem:[%s834 + $0x170] sm:$0xf]
                  %929 = vst [vmem:[%s835 + $0xb8] sm:$0xf] %v928
                  %v930 = vld [vmem:[%s834 + $0x178] sm:$0xf]
                  %931 = vst [vmem:[%s835 + $0xbc] sm:$0xf] %v930
                $region135: #{bayesian_linear.1} parent=122 // loop_footer
                  %s833 = sadd.s32 1, %s829
                $region136: #{bayesian_linear.1} parent=122 // loop_footer_branch
                  %828 = sbr.rel target = $region132
                $region137: #{bayesian_linear.1} parent=122 // loop_exit
                  _
              $region123: #{bayesian_linear.1} parent=107 // pred_fallthru
                _
            $region108: #{bayesian_linear.1} parent=103 // pred_fallthru
              _
            // Predicated region
            $region109: #{bayesian_linear.1} parent=103 // pred_check
              _
            $region110: #{bayesian_linear.1} parent=103 // pred_check_branch
              %711 = sbr.rel (0) target = $region112
            $region111: #{bayesian_linear.1} parent=103 // pred_region
              loop: start=0, step=1, limit=1
              $region113: #{bayesian_linear.1} parent=111 // loop_pre_header
                _
              $region114: #{bayesian_linear.1} parent=111 // loop_header
                %s714 = sphi 0, %s718
                %p715 = scmp.ge.s32.totalorder %s714, 1
                %s719 = sphi %s705, %s705
                %s720 = sphi %s700, %s700
              $region115: #{bayesian_linear.1} parent=111 // loop_header_branch
                %717 = sbr.rel (%p715) target = $region119
              $region116: #{bayesian_linear.1} parent=111 // loop_body
                %v721 = vld [vmem:[%s719] sm:$0xf]
                %722 = vst [vmem:[%s720] sm:$0xf] %v721
                %v723 = vld [vmem:[%s719 + $0x8] sm:$0xf]
                %724 = vst [vmem:[%s720 + $0x4] sm:$0xf] %v723
                %v725 = vld [vmem:[%s719 + $0x10] sm:$0xf]
                %726 = vst [vmem:[%s720 + $0x8] sm:$0xf] %v725
                %v727 = vld [vmem:[%s719 + $0x18] sm:$0xf]
                %728 = vst [vmem:[%s720 + $0xc] sm:$0xf] %v727
                %v729 = vld [vmem:[%s719 + $0x20] sm:$0xf]
                %730 = vst [vmem:[%s720 + $0x10] sm:$0xf] %v729
                %v731 = vld [vmem:[%s719 + $0x28] sm:$0xf]
                %732 = vst [vmem:[%s720 + $0x14] sm:$0xf] %v731
                %v733 = vld [vmem:[%s719 + $0x30] sm:$0xf]
                %734 = vst [vmem:[%s720 + $0x18] sm:$0xf] %v733
                %v735 = vld [vmem:[%s719 + $0x38] sm:$0xf]
                %736 = vst [vmem:[%s720 + $0x1c] sm:$0xf] %v735
                %v737 = vld [vmem:[%s719 + $0x40] sm:$0xf]
                %738 = vst [vmem:[%s720 + $0x20] sm:$0xf] %v737
                %v739 = vld [vmem:[%s719 + $0x48] sm:$0xf]
                %740 = vst [vmem:[%s720 + $0x24] sm:$0xf] %v739
                %v741 = vld [vmem:[%s719 + $0x50] sm:$0xf]
                %742 = vst [vmem:[%s720 + $0x28] sm:$0xf] %v741
                %v743 = vld [vmem:[%s719 + $0x58] sm:$0xf]
                %744 = vst [vmem:[%s720 + $0x2c] sm:$0xf] %v743
                %v745 = vld [vmem:[%s719 + $0x60] sm:$0xf]
                %746 = vst [vmem:[%s720 + $0x30] sm:$0xf] %v745
                %v747 = vld [vmem:[%s719 + $0x68] sm:$0xf]
                %748 = vst [vmem:[%s720 + $0x34] sm:$0xf] %v747
                %v749 = vld [vmem:[%s719 + $0x70] sm:$0xf]
                %750 = vst [vmem:[%s720 + $0x38] sm:$0xf] %v749
                %v751 = vld [vmem:[%s719 + $0x78] sm:$0xf]
                %752 = vst [vmem:[%s720 + $0x3c] sm:$0xf] %v751
                %v753 = vld [vmem:[%s719 + $0x80] sm:$0xf]
                %754 = vst [vmem:[%s720 + $0x40] sm:$0xf] %v753
                %v755 = vld [vmem:[%s719 + $0x88] sm:$0xf]
                %756 = vst [vmem:[%s720 + $0x44] sm:$0xf] %v755
                %v757 = vld [vmem:[%s719 + $0x90] sm:$0xf]
                %758 = vst [vmem:[%s720 + $0x48] sm:$0xf] %v757
                %v759 = vld [vmem:[%s719 + $0x98] sm:$0xf]
                %760 = vst [vmem:[%s720 + $0x4c] sm:$0xf] %v759
                %v761 = vld [vmem:[%s719 + $0xa0] sm:$0xf]
                %762 = vst [vmem:[%s720 + $0x50] sm:$0xf] %v761
                %v763 = vld [vmem:[%s719 + $0xa8] sm:$0xf]
                %764 = vst [vmem:[%s720 + $0x54] sm:$0xf] %v763
                %v765 = vld [vmem:[%s719 + $0xb0] sm:$0xf]
                %766 = vst [vmem:[%s720 + $0x58] sm:$0xf] %v765
                %v767 = vld [vmem:[%s719 + $0xb8] sm:$0xf]
                %768 = vst [vmem:[%s720 + $0x5c] sm:$0xf] %v767
                %v769 = vld [vmem:[%s719 + $0xc0] sm:$0xf]
                %770 = vst [vmem:[%s720 + $0x60] sm:$0xf] %v769
                %v771 = vld [vmem:[%s719 + $0xc8] sm:$0xf]
                %772 = vst [vmem:[%s720 + $0x64] sm:$0xf] %v771
                %v773 = vld [vmem:[%s719 + $0xd0] sm:$0xf]
                %774 = vst [vmem:[%s720 + $0x68] sm:$0xf] %v773
                %v775 = vld [vmem:[%s719 + $0xd8] sm:$0xf]
                %776 = vst [vmem:[%s720 + $0x6c] sm:$0xf] %v775
                %v777 = vld [vmem:[%s719 + $0xe0] sm:$0xf]
                %778 = vst [vmem:[%s720 + $0x70] sm:$0xf] %v777
                %v779 = vld [vmem:[%s719 + $0xe8] sm:$0xf]
                %780 = vst [vmem:[%s720 + $0x74] sm:$0xf] %v779
                %v781 = vld [vmem:[%s719 + $0xf0] sm:$0xf]
                %782 = vst [vmem:[%s720 + $0x78] sm:$0xf] %v781
                %v783 = vld [vmem:[%s719 + $0xf8] sm:$0xf]
                %784 = vst [vmem:[%s720 + $0x7c] sm:$0xf] %v783
                %v785 = vld [vmem:[%s719 + $0x100] sm:$0xf]
                %786 = vst [vmem:[%s720 + $0x80] sm:$0xf] %v785
                %v787 = vld [vmem:[%s719 + $0x108] sm:$0xf]
                %788 = vst [vmem:[%s720 + $0x84] sm:$0xf] %v787
                %v789 = vld [vmem:[%s719 + $0x110] sm:$0xf]
                %790 = vst [vmem:[%s720 + $0x88] sm:$0xf] %v789
                %v791 = vld [vmem:[%s719 + $0x118] sm:$0xf]
                %792 = vst [vmem:[%s720 + $0x8c] sm:$0xf] %v791
                %v793 = vld [vmem:[%s719 + $0x120] sm:$0xf]
                %794 = vst [vmem:[%s720 + $0x90] sm:$0xf] %v793
                %v795 = vld [vmem:[%s719 + $0x128] sm:$0xf]
                %796 = vst [vmem:[%s720 + $0x94] sm:$0xf] %v795
                %v797 = vld [vmem:[%s719 + $0x130] sm:$0xf]
                %798 = vst [vmem:[%s720 + $0x98] sm:$0xf] %v797
                %v799 = vld [vmem:[%s719 + $0x138] sm:$0xf]
                %800 = vst [vmem:[%s720 + $0x9c] sm:$0xf] %v799
                %v801 = vld [vmem:[%s719 + $0x140] sm:$0xf]
                %802 = vst [vmem:[%s720 + $0xa0] sm:$0xf] %v801
                %v803 = vld [vmem:[%s719 + $0x148] sm:$0xf]
                %804 = vst [vmem:[%s720 + $0xa4] sm:$0xf] %v803
                %v805 = vld [vmem:[%s719 + $0x150] sm:$0xf]
                %806 = vst [vmem:[%s720 + $0xa8] sm:$0xf] %v805
                %v807 = vld [vmem:[%s719 + $0x158] sm:$0xf]
                %808 = vst [vmem:[%s720 + $0xac] sm:$0xf] %v807
                %v809 = vld [vmem:[%s719 + $0x160] sm:$0xf]
                %810 = vst [vmem:[%s720 + $0xb0] sm:$0xf] %v809
                %v811 = vld [vmem:[%s719 + $0x168] sm:$0xf]
                %812 = vst [vmem:[%s720 + $0xb4] sm:$0xf] %v811
                %v813 = vld [vmem:[%s719 + $0x170] sm:$0xf]
                %814 = vst [vmem:[%s720 + $0xb8] sm:$0xf] %v813
                %v815 = vld [vmem:[%s719 + $0x178] sm:$0xf]
                %816 = vst [vmem:[%s720 + $0xbc] sm:$0xf] %v815
              $region117: #{bayesian_linear.1} parent=111 // loop_footer
                %s718 = sadd.s32 1, %s714
              $region118: #{bayesian_linear.1} parent=111 // loop_footer_branch
                %713 = sbr.rel target = $region114
              $region119: #{bayesian_linear.1} parent=111 // loop_exit
                _
            $region112: #{bayesian_linear.1} parent=103 // pred_fallthru
              _
          $region104: #{bayesian_linear.1} parent=99 // pred_fallthru
            _
          %932 = vnop
        $region100: #{bayesian_linear.1} parent=19 // pred_fallthru
          _
        // Predicated region
        $region138: #{bayesian_linear.1} parent=19 // pred_check
          %p933 = pneg %p162
        $region139: #{bayesian_linear.1} parent=19 // pred_check_branch
          %935 = sbr.rel (%p933) target = $region141
        $region140: #{bayesian_linear.1} parent=19 // pred_region
          %p936 = scmp.lt.s32.totalorder %s19, 1
          %s937 = scalar_select %p936, %s19, 1
          %s938 = scalar_lea.vmem %s4, %s937
        $region141: #{bayesian_linear.1} parent=19 // pred_fallthru
          _
      $region20: #{bayesian_linear.1} parent=5 // pred_fallthru
        _
      %p939 = scmp.le.s32.totalorder 1, %s11
      %p940 = scmp.lt.s32.totalorder %s11, 3
      %p941 = pnand %p939, %p940
      %p942 = pneg %p941
      // Predicated region
      $region142: #{bayesian_linear.1} parent=5 // pred_check
        _
      $region143: #{bayesian_linear.1} parent=5 // pred_check_branch
        %944 = sbr.rel (%p941) target = $region145
      $region144: #{bayesian_linear.1} parent=5 // pred_region
        %s945 = ssub.s32 %s11, 1
        %s946 = sand.u32 %s73, 1
        %s947 = sand.u32 %s73, 1
        %s948 = smul.addr %s947, 384
        %s949 = scalar_lea.vmem [#allocation2], %s948
        // Predicated region
        $region146: #{bayesian_linear.1} parent=144 // pred_check
          %p950 = pneg %p86
        $region147: #{bayesian_linear.1} parent=144 // pred_check_branch
          %952 = sbr.rel (%p950) target = $region149
        $region148: #{bayesian_linear.1} parent=144 // pred_region
          _
        $region149: #{bayesian_linear.1} parent=144 // pred_fallthru
          _
        %s953 = sand.u32 %s101, 1
        %s954 = sand.u32 %s101, 1
        %s955 = smul.addr %s954, 384
        %s956 = scalar_lea.vmem [#allocation3], %s955
        // Predicated region
        $region150: #{bayesian_linear.1} parent=144 // pred_check
          %p957 = pneg %p114
        $region151: #{bayesian_linear.1} parent=144 // pred_check_branch
          %959 = sbr.rel (%p957) target = $region153
        $region152: #{bayesian_linear.1} parent=144 // pred_region
          _
        $region153: #{bayesian_linear.1} parent=144 // pred_fallthru
          _
        %s960 = sand.u32 %s129, 1
        %s961 = sand.u32 %s129, 1
        %s962 = smul.addr %s961, 192
        %s963 = scalar_lea.vmem [#allocation4], %s962
        // Predicated region
        $region154: #{bayesian_linear.1} parent=144 // pred_check
          %p964 = pneg %p142
        $region155: #{bayesian_linear.1} parent=144 // pred_check_branch
          %966 = sbr.rel (%p964) target = $region157
        $region156: #{bayesian_linear.1} parent=144 // pred_region
          _
        $region157: #{bayesian_linear.1} parent=144 // pred_fallthru
          _
        %s967 = smul.u32 4, %s21
        %s968 = smul.u32 3, %s23
        %p969 = scmp.lt.s32.totalorder %s967, 3
        %s970 = scalar_select %p969, %s967, 3
        %p971 = scmp.lt.s32.totalorder %s968, 2
        %s972 = scalar_select %p971, %s968, 2
        %s973 = smul.addr %s970, 3
        %s974 = sadd.s32 %s972, %s973
        %s975 = smul.addr %s974, 4
        %s976 = scalar_lea.vmem %s0, %s975
        %p977 = pneg %p58
        %p978 = pneg %p55
        %s979 = sand.u32 %s73, 1
        %s980 = sand.u32 %s73, 1
        %s981 = smul.addr %s980, 384
        %s982 = scalar_lea.vmem [#allocation2], %s981
        %p983 = pneg %p86
        %p984 = pneg %p83
        %s985 = sand.u32 %s101, 1
        %s986 = sand.u32 %s101, 1
        %s987 = smul.addr %s986, 384
        %s988 = scalar_lea.vmem [#allocation3], %s987
        %p989 = pneg %p114
        %p990 = pneg %p111
        %s991 = sand.u32 %s129, 1
        %s992 = sand.u32 %s129, 1
        %s993 = smul.addr %s992, 192
        %s994 = scalar_lea.vmem [#allocation4], %s993
        %p995 = pneg %p142
        %p996 = pneg %p139
        %p997 = scmp.lt.s32.totalorder %s22, 1
        %s998 = scalar_select %p997, %s22, 1
        %s999 = scalar_lea.vmem %s4, %s998
        %p1000 = pneg %p168
        %p1001 = pneg %p165
        %p1002 = pneg %p196
        %p1003 = pneg %p193
        %s1004 = sand.u32 %s183, 1
        %s1005 = sand.u32 %s183, 1
        %s1006 = smul.addr %s1005, 32
        %s1007 = scalar_lea.vmem [#allocation5], %s1006
        %s1008 = smul.u32 4, %s21
        %s1009 = smul.u32 3, %s23
        %p1010 = scmp.lt.s32.totalorder %s1008, 3
        %s1011 = scalar_select %p1010, %s1008, 3
        %p1012 = scmp.lt.s32.totalorder %s1009, 2
        %s1013 = scalar_select %p1012, %s1009, 2
        %s1014 = smul.addr %s1011, 3
        %s1015 = sadd.s32 %s1013, %s1014
        %s1016 = smul.addr %s1015, 4
        %s1017 = scalar_lea.vmem %s0, %s1016
        %s1018 = smul.u32 4, %s21
        %s1019 = smul.u32 3, %s23
        %s1020 = smul.u32 48, %s23
        %s1021 = smul.u32 48, %s23
        %s1022 = smul.u32 48, %s23
        %p1023 = scmp.lt.s32.totalorder %s22, 1
        %s1024 = scalar_select %p1023, %s22, 1
        %s1025 = scalar_lea.vmem %s4, %s1024
        %s1026 = smul.u32 4, %s21
        %v1028 = vld [vmem:[%s956] sm:$0xff]
        %v1029 = vld [vmem:[%s956 + $0x8] sm:$0xff]
        %v1030 = vld [vmem:[%s956 + $0x10] sm:$0xff]
        %v1031 = vld [vmem:[%s956 + $0x18] sm:$0xff]
        %v1032 = vld [vmem:[%s956 + $0x20] sm:$0xff]
        %v1033 = vld [vmem:[%s956 + $0x28] sm:$0xff]
        %v1034 = vld [vmem:[%s956 + $0x30] sm:$0xff]
        %v1035 = vld [vmem:[%s956 + $0x38] sm:$0xff]
        %v1036 = vld [vmem:[%s956 + $0x40] sm:$0xff]
        %v1037 = vld [vmem:[%s956 + $0x48] sm:$0xff]
        %v1038 = vld [vmem:[%s956 + $0x50] sm:$0xff]
        %v1039 = vld [vmem:[%s956 + $0x58] sm:$0xff]
        %v1040 = vld [vmem:[%s956 + $0x60] sm:$0xff]
        %v1041 = vld [vmem:[%s956 + $0x68] sm:$0xff]
        %v1042 = vld [vmem:[%s956 + $0x70] sm:$0xff]
        %v1043 = vld [vmem:[%s956 + $0x78] sm:$0xff]
        %v1044 = vld [vmem:[%s956 + $0x80] sm:$0xff]
        %v1045 = vld [vmem:[%s956 + $0x88] sm:$0xff]
        %v1046 = vld [vmem:[%s956 + $0x90] sm:$0xff]
        %v1047 = vld [vmem:[%s956 + $0x98] sm:$0xff]
        %v1048 = vld [vmem:[%s956 + $0xa0] sm:$0xff]
        %v1049 = vld [vmem:[%s956 + $0xa8] sm:$0xff]
        %v1050 = vld [vmem:[%s956 + $0xb0] sm:$0xff]
        %v1051 = vld [vmem:[%s956 + $0xb8] sm:$0xff]
        %v1052 = vld [vmem:[%s956 + $0xc0] sm:$0xff]
        %v1053 = vld [vmem:[%s956 + $0xc8] sm:$0xff]
        %v1054 = vld [vmem:[%s956 + $0xd0] sm:$0xff]
        %v1055 = vld [vmem:[%s956 + $0xd8] sm:$0xff]
        %v1056 = vld [vmem:[%s956 + $0xe0] sm:$0xff]
        %v1057 = vld [vmem:[%s956 + $0xe8] sm:$0xff]
        %v1058 = vld [vmem:[%s956 + $0xf0] sm:$0xff]
        %v1059 = vld [vmem:[%s956 + $0xf8] sm:$0xff]
        %v1060 = vld [vmem:[%s956 + $0x100] sm:$0xff]
        %v1061 = vld [vmem:[%s956 + $0x108] sm:$0xff]
        %v1062 = vld [vmem:[%s956 + $0x110] sm:$0xff]
        %v1063 = vld [vmem:[%s956 + $0x118] sm:$0xff]
        %v1064 = vld [vmem:[%s956 + $0x120] sm:$0xff]
        %v1065 = vld [vmem:[%s956 + $0x128] sm:$0xff]
        %v1066 = vld [vmem:[%s956 + $0x130] sm:$0xff]
        %v1067 = vld [vmem:[%s956 + $0x138] sm:$0xff]
        %v1068 = vld [vmem:[%s956 + $0x140] sm:$0xff]
        %v1069 = vld [vmem:[%s956 + $0x148] sm:$0xff]
        %v1070 = vld [vmem:[%s956 + $0x150] sm:$0xff]
        %v1071 = vld [vmem:[%s956 + $0x158] sm:$0xff]
        %v1072 = vld [vmem:[%s956 + $0x160] sm:$0xff]
        %v1073 = vld [vmem:[%s956 + $0x168] sm:$0xff]
        %v1074 = vld [vmem:[%s956 + $0x170] sm:$0xff]
        %v1075 = vld [vmem:[%s956 + $0x178] sm:$0xff]
        %v1076 = vmax.f32 %v1028, 0.0
        %v1077 = vmax.f32 %v1029, 0.0
        %v1078 = vmax.f32 %v1030, 0.0
        %v1079 = vmax.f32 %v1031, 0.0
        %v1080 = vmax.f32 %v1032, 0.0
        %v1081 = vmax.f32 %v1033, 0.0
        %v1082 = vmax.f32 %v1034, 0.0
        %v1083 = vmax.f32 %v1035, 0.0
        %v1084 = vmax.f32 %v1036, 0.0
        %v1085 = vmax.f32 %v1037, 0.0
        %v1086 = vmax.f32 %v1038, 0.0
        %v1087 = vmax.f32 %v1039, 0.0
        %v1088 = vmax.f32 %v1040, 0.0
        %v1089 = vmax.f32 %v1041, 0.0
        %v1090 = vmax.f32 %v1042, 0.0
        %v1091 = vmax.f32 %v1043, 0.0
        %v1092 = vmax.f32 %v1044, 0.0
        %v1093 = vmax.f32 %v1045, 0.0
        %v1094 = vmax.f32 %v1046, 0.0
        %v1095 = vmax.f32 %v1047, 0.0
        %v1096 = vmax.f32 %v1048, 0.0
        %v1097 = vmax.f32 %v1049, 0.0
        %v1098 = vmax.f32 %v1050, 0.0
        %v1099 = vmax.f32 %v1051, 0.0
        %v1100 = vmax.f32 %v1052, 0.0
        %v1101 = vmax.f32 %v1053, 0.0
        %v1102 = vmax.f32 %v1054, 0.0
        %v1103 = vmax.f32 %v1055, 0.0
        %v1104 = vmax.f32 %v1056, 0.0
        %v1105 = vmax.f32 %v1057, 0.0
        %v1106 = vmax.f32 %v1058, 0.0
        %v1107 = vmax.f32 %v1059, 0.0
        %v1108 = vmax.f32 %v1060, 0.0
        %v1109 = vmax.f32 %v1061, 0.0
        %v1110 = vmax.f32 %v1062, 0.0
        %v1111 = vmax.f32 %v1063, 0.0
        %v1112 = vmax.f32 %v1064, 0.0
        %v1113 = vmax.f32 %v1065, 0.0
        %v1114 = vmax.f32 %v1066, 0.0
        %v1115 = vmax.f32 %v1067, 0.0
        %v1116 = vmax.f32 %v1068, 0.0
        %v1117 = vmax.f32 %v1069, 0.0
        %v1118 = vmax.f32 %v1070, 0.0
        %v1119 = vmax.f32 %v1071, 0.0
        %v1120 = vmax.f32 %v1072, 0.0
        %v1121 = vmax.f32 %v1073, 0.0
        %v1122 = vmax.f32 %v1074, 0.0
        %v1123 = vmax.f32 %v1075, 0.0
        %v1124 = vand.u32 2147483647, %v1028
        %v1125 = vand.u32 2147483647, %v1029
        %v1126 = vand.u32 2147483647, %v1030
        %v1127 = vand.u32 2147483647, %v1031
        %v1128 = vand.u32 2147483647, %v1032
        %v1129 = vand.u32 2147483647, %v1033
        %v1130 = vand.u32 2147483647, %v1034
        %v1131 = vand.u32 2147483647, %v1035
        %v1132 = vand.u32 2147483647, %v1036
        %v1133 = vand.u32 2147483647, %v1037
        %v1134 = vand.u32 2147483647, %v1038
        %v1135 = vand.u32 2147483647, %v1039
        %v1136 = vand.u32 2147483647, %v1040
        %v1137 = vand.u32 2147483647, %v1041
        %v1138 = vand.u32 2147483647, %v1042
        %v1139 = vand.u32 2147483647, %v1043
        %v1140 = vand.u32 2147483647, %v1044
        %v1141 = vand.u32 2147483647, %v1045
        %v1142 = vand.u32 2147483647, %v1046
        %v1143 = vand.u32 2147483647, %v1047
        %v1144 = vand.u32 2147483647, %v1048
        %v1145 = vand.u32 2147483647, %v1049
        %v1146 = vand.u32 2147483647, %v1050
        %v1147 = vand.u32 2147483647, %v1051
        %v1148 = vand.u32 2147483647, %v1052
        %v1149 = vand.u32 2147483647, %v1053
        %v1150 = vand.u32 2147483647, %v1054
        %v1151 = vand.u32 2147483647, %v1055
        %v1152 = vand.u32 2147483647, %v1056
        %v1153 = vand.u32 2147483647, %v1057
        %v1154 = vand.u32 2147483647, %v1058
        %v1155 = vand.u32 2147483647, %v1059
        %v1156 = vand.u32 2147483647, %v1060
        %v1157 = vand.u32 2147483647, %v1061
        %v1158 = vand.u32 2147483647, %v1062
        %v1159 = vand.u32 2147483647, %v1063
        %v1160 = vand.u32 2147483647, %v1064
        %v1161 = vand.u32 2147483647, %v1065
        %v1162 = vand.u32 2147483647, %v1066
        %v1163 = vand.u32 2147483647, %v1067
        %v1164 = vand.u32 2147483647, %v1068
        %v1165 = vand.u32 2147483647, %v1069
        %v1166 = vand.u32 2147483647, %v1070
        %v1167 = vand.u32 2147483647, %v1071
        %v1168 = vand.u32 2147483647, %v1072
        %v1169 = vand.u32 2147483647, %v1073
        %v1170 = vand.u32 2147483647, %v1074
        %v1171 = vand.u32 2147483647, %v1075
        %v1172 = vsub.f32 0.0, %v1124
        %v1173 = vsub.f32 0.0, %v1125
        %v1174 = vsub.f32 0.0, %v1126
        %v1175 = vsub.f32 0.0, %v1127
        %v1176 = vsub.f32 0.0, %v1128
        %v1177 = vsub.f32 0.0, %v1129
        %v1178 = vsub.f32 0.0, %v1130
        %v1179 = vsub.f32 0.0, %v1131
        %v1180 = vsub.f32 0.0, %v1132
        %v1181 = vsub.f32 0.0, %v1133
        %v1182 = vsub.f32 0.0, %v1134
        %v1183 = vsub.f32 0.0, %v1135
        %v1184 = vsub.f32 0.0, %v1136
        %v1185 = vsub.f32 0.0, %v1137
        %v1186 = vsub.f32 0.0, %v1138
        %v1187 = vsub.f32 0.0, %v1139
        %v1188 = vsub.f32 0.0, %v1140
        %v1189 = vsub.f32 0.0, %v1141
        %v1190 = vsub.f32 0.0, %v1142
        %v1191 = vsub.f32 0.0, %v1143
        %v1192 = vsub.f32 0.0, %v1144
        %v1193 = vsub.f32 0.0, %v1145
        %v1194 = vsub.f32 0.0, %v1146
        %v1195 = vsub.f32 0.0, %v1147
        %v1196 = vsub.f32 0.0, %v1148
        %v1197 = vsub.f32 0.0, %v1149
        %v1198 = vsub.f32 0.0, %v1150
        %v1199 = vsub.f32 0.0, %v1151
        %v1200 = vsub.f32 0.0, %v1152
        %v1201 = vsub.f32 0.0, %v1153
        %v1202 = vsub.f32 0.0, %v1154
        %v1203 = vsub.f32 0.0, %v1155
        %v1204 = vsub.f32 0.0, %v1156
        %v1205 = vsub.f32 0.0, %v1157
        %v1206 = vsub.f32 0.0, %v1158
        %v1207 = vsub.f32 0.0, %v1159
        %v1208 = vsub.f32 0.0, %v1160
        %v1209 = vsub.f32 0.0, %v1161
        %v1210 = vsub.f32 0.0, %v1162
        %v1211 = vsub.f32 0.0, %v1163
        %v1212 = vsub.f32 0.0, %v1164
        %v1213 = vsub.f32 0.0, %v1165
        %v1214 = vsub.f32 0.0, %v1166
        %v1215 = vsub.f32 0.0, %v1167
        %v1216 = vsub.f32 0.0, %v1168
        %v1217 = vsub.f32 0.0, %v1169
        %v1218 = vsub.f32 0.0, %v1170
        %v1219 = vsub.f32 0.0, %v1171
        %v1220 = vmul.f32 %v1172, 1.442695
        %v1221 = vpow.pop %v1220
        %v1222 = vmul.f32 %v1173, 1.442695
        %v1223 = vpow.pop %v1222
        %v1224 = vmul.f32 %v1174, 1.442695
        %v1225 = vpow.pop %v1224
        %v1226 = vmul.f32 %v1175, 1.442695
        %v1227 = vpow.pop %v1226
        %v1228 = vmul.f32 %v1176, 1.442695
        %v1229 = vpow.pop %v1228
        %v1230 = vmul.f32 %v1177, 1.442695
        %v1231 = vpow.pop %v1230
        %v1232 = vmul.f32 %v1178, 1.442695
        %v1233 = vpow.pop %v1232
        %v1234 = vmul.f32 %v1179, 1.442695
        %v1235 = vpow.pop %v1234
        %v1236 = vmul.f32 %v1180, 1.442695
        %v1237 = vpow.pop %v1236
        %v1238 = vmul.f32 %v1181, 1.442695
        %v1239 = vpow.pop %v1238
        %v1240 = vmul.f32 %v1182, 1.442695
        %v1241 = vpow.pop %v1240
        %v1242 = vmul.f32 %v1183, 1.442695
        %v1243 = vpow.pop %v1242
        %v1244 = vmul.f32 %v1184, 1.442695
        %v1245 = vpow.pop %v1244
        %v1246 = vmul.f32 %v1185, 1.442695
        %v1247 = vpow.pop %v1246
        %v1248 = vmul.f32 %v1186, 1.442695
        %v1249 = vpow.pop %v1248
        %v1250 = vmul.f32 %v1187, 1.442695
        %v1251 = vpow.pop %v1250
        %v1252 = vmul.f32 %v1188, 1.442695
        %v1253 = vpow.pop %v1252
        %v1254 = vmul.f32 %v1189, 1.442695
        %v1255 = vpow.pop %v1254
        %v1256 = vmul.f32 %v1190, 1.442695
        %v1257 = vpow.pop %v1256
        %v1258 = vmul.f32 %v1191, 1.442695
        %v1259 = vpow.pop %v1258
        %v1260 = vmul.f32 %v1192, 1.442695
        %v1261 = vpow.pop %v1260
        %v1262 = vmul.f32 %v1193, 1.442695
        %v1263 = vpow.pop %v1262
        %v1264 = vmul.f32 %v1194, 1.442695
        %v1265 = vpow.pop %v1264
        %v1266 = vmul.f32 %v1195, 1.442695
        %v1267 = vpow.pop %v1266
        %v1268 = vmul.f32 %v1196, 1.442695
        %v1269 = vpow.pop %v1268
        %v1270 = vmul.f32 %v1197, 1.442695
        %v1271 = vpow.pop %v1270
        %v1272 = vmul.f32 %v1198, 1.442695
        %v1273 = vpow.pop %v1272
        %v1274 = vmul.f32 %v1199, 1.442695
        %v1275 = vpow.pop %v1274
        %v1276 = vmul.f32 %v1200, 1.442695
        %v1277 = vpow.pop %v1276
        %v1278 = vmul.f32 %v1201, 1.442695
        %v1279 = vpow.pop %v1278
        %v1280 = vmul.f32 %v1202, 1.442695
        %v1281 = vpow.pop %v1280
        %v1282 = vmul.f32 %v1203, 1.442695
        %v1283 = vpow.pop %v1282
        %v1284 = vmul.f32 %v1204, 1.442695
        %v1285 = vpow.pop %v1284
        %v1286 = vmul.f32 %v1205, 1.442695
        %v1287 = vpow.pop %v1286
        %v1288 = vmul.f32 %v1206, 1.442695
        %v1289 = vpow.pop %v1288
        %v1290 = vmul.f32 %v1207, 1.442695
        %v1291 = vpow.pop %v1290
        %v1292 = vmul.f32 %v1208, 1.442695
        %v1293 = vpow.pop %v1292
        %v1294 = vmul.f32 %v1209, 1.442695
        %v1295 = vpow.pop %v1294
        %v1296 = vmul.f32 %v1210, 1.442695
        %v1297 = vpow.pop %v1296
        %v1298 = vmul.f32 %v1211, 1.442695
        %v1299 = vpow.pop %v1298
        %v1300 = vmul.f32 %v1212, 1.442695
        %v1301 = vpow.pop %v1300
        %v1302 = vmul.f32 %v1213, 1.442695
        %v1303 = vpow.pop %v1302
        %v1304 = vmul.f32 %v1214, 1.442695
        %v1305 = vpow.pop %v1304
        %v1306 = vmul.f32 %v1215, 1.442695
        %v1307 = vpow.pop %v1306
        %v1308 = vmul.f32 %v1216, 1.442695
        %v1309 = vpow.pop %v1308
        %v1310 = vmul.f32 %v1217, 1.442695
        %v1311 = vpow.pop %v1310
        %v1312 = vmul.f32 %v1218, 1.442695
        %v1313 = vpow.pop %v1312
        %v1314 = vmul.f32 %v1219, 1.442695
        %v1315 = vpow.pop %v1314
        %v1316 = vadd.f32 %v1221, 1.0
        %v1317 = vlog2.pop %v1316
        %v1318 = vmul.f32 %v1317, 0.6931472
        %v1319 = vmul.f32 -0.5, %v1221
        %v1320 = vadd.f32 %v1319, 1.0
        %v1321 = vmul.f32 %v1320, %v1221
        %v1322 = vand.u32 2147483647, %v1221
        %vm1323 = vcmp.lt.f32.partialorder %v1322, 0.0004427343
        %v1324 = vsel %vm1323, %v1321, %v1318
        %v1325 = vadd.f32 %v1223, 1.0
        %v1326 = vlog2.pop %v1325
        %v1327 = vmul.f32 %v1326, 0.6931472
        %v1328 = vmul.f32 -0.5, %v1223
        %v1329 = vadd.f32 %v1328, 1.0
        %v1330 = vmul.f32 %v1329, %v1223
        %v1331 = vand.u32 2147483647, %v1223
        %vm1332 = vcmp.lt.f32.partialorder %v1331, 0.0004427343
        %v1333 = vsel %vm1332, %v1330, %v1327
        %v1334 = vadd.f32 %v1225, 1.0
        %v1335 = vlog2.pop %v1334
        %v1336 = vmul.f32 %v1335, 0.6931472
        %v1337 = vmul.f32 -0.5, %v1225
        %v1338 = vadd.f32 %v1337, 1.0
        %v1339 = vmul.f32 %v1338, %v1225
        %v1340 = vand.u32 2147483647, %v1225
        %vm1341 = vcmp.lt.f32.partialorder %v1340, 0.0004427343
        %v1342 = vsel %vm1341, %v1339, %v1336
        %v1343 = vadd.f32 %v1227, 1.0
        %v1344 = vlog2.pop %v1343
        %v1345 = vmul.f32 %v1344, 0.6931472
        %v1346 = vmul.f32 -0.5, %v1227
        %v1347 = vadd.f32 %v1346, 1.0
        %v1348 = vmul.f32 %v1347, %v1227
        %v1349 = vand.u32 2147483647, %v1227
        %vm1350 = vcmp.lt.f32.partialorder %v1349, 0.0004427343
        %v1351 = vsel %vm1350, %v1348, %v1345
        %v1352 = vadd.f32 %v1229, 1.0
        %v1353 = vlog2.pop %v1352
        %v1354 = vmul.f32 %v1353, 0.6931472
        %v1355 = vmul.f32 -0.5, %v1229
        %v1356 = vadd.f32 %v1355, 1.0
        %v1357 = vmul.f32 %v1356, %v1229
        %v1358 = vand.u32 2147483647, %v1229
        %vm1359 = vcmp.lt.f32.partialorder %v1358, 0.0004427343
        %v1360 = vsel %vm1359, %v1357, %v1354
        %v1361 = vadd.f32 %v1231, 1.0
        %v1362 = vlog2.pop %v1361
        %v1363 = vmul.f32 %v1362, 0.6931472
        %v1364 = vmul.f32 -0.5, %v1231
        %v1365 = vadd.f32 %v1364, 1.0
        %v1366 = vmul.f32 %v1365, %v1231
        %v1367 = vand.u32 2147483647, %v1231
        %vm1368 = vcmp.lt.f32.partialorder %v1367, 0.0004427343
        %v1369 = vsel %vm1368, %v1366, %v1363
        %v1370 = vadd.f32 %v1233, 1.0
        %v1371 = vlog2.pop %v1370
        %v1372 = vmul.f32 %v1371, 0.6931472
        %v1373 = vmul.f32 -0.5, %v1233
        %v1374 = vadd.f32 %v1373, 1.0
        %v1375 = vmul.f32 %v1374, %v1233
        %v1376 = vand.u32 2147483647, %v1233
        %vm1377 = vcmp.lt.f32.partialorder %v1376, 0.0004427343
        %v1378 = vsel %vm1377, %v1375, %v1372
        %v1379 = vadd.f32 %v1235, 1.0
        %v1380 = vlog2.pop %v1379
        %v1381 = vmul.f32 %v1380, 0.6931472
        %v1382 = vmul.f32 -0.5, %v1235
        %v1383 = vadd.f32 %v1382, 1.0
        %v1384 = vmul.f32 %v1383, %v1235
        %v1385 = vand.u32 2147483647, %v1235
        %vm1386 = vcmp.lt.f32.partialorder %v1385, 0.0004427343
        %v1387 = vsel %vm1386, %v1384, %v1381
        %v1388 = vadd.f32 %v1237, 1.0
        %v1389 = vlog2.pop %v1388
        %v1390 = vmul.f32 %v1389, 0.6931472
        %v1391 = vmul.f32 -0.5, %v1237
        %v1392 = vadd.f32 %v1391, 1.0
        %v1393 = vmul.f32 %v1392, %v1237
        %v1394 = vand.u32 2147483647, %v1237
        %vm1395 = vcmp.lt.f32.partialorder %v1394, 0.0004427343
        %v1396 = vsel %vm1395, %v1393, %v1390
        %v1397 = vadd.f32 %v1239, 1.0
        %v1398 = vlog2.pop %v1397
        %v1399 = vmul.f32 %v1398, 0.6931472
        %v1400 = vmul.f32 -0.5, %v1239
        %v1401 = vadd.f32 %v1400, 1.0
        %v1402 = vmul.f32 %v1401, %v1239
        %v1403 = vand.u32 2147483647, %v1239
        %vm1404 = vcmp.lt.f32.partialorder %v1403, 0.0004427343
        %v1405 = vsel %vm1404, %v1402, %v1399
        %v1406 = vadd.f32 %v1241, 1.0
        %v1407 = vlog2.pop %v1406
        %v1408 = vmul.f32 %v1407, 0.6931472
        %v1409 = vmul.f32 -0.5, %v1241
        %v1410 = vadd.f32 %v1409, 1.0
        %v1411 = vmul.f32 %v1410, %v1241
        %v1412 = vand.u32 2147483647, %v1241
        %vm1413 = vcmp.lt.f32.partialorder %v1412, 0.0004427343
        %v1414 = vsel %vm1413, %v1411, %v1408
        %v1415 = vadd.f32 %v1243, 1.0
        %v1416 = vlog2.pop %v1415
        %v1417 = vmul.f32 %v1416, 0.6931472
        %v1418 = vmul.f32 -0.5, %v1243
        %v1419 = vadd.f32 %v1418, 1.0
        %v1420 = vmul.f32 %v1419, %v1243
        %v1421 = vand.u32 2147483647, %v1243
        %vm1422 = vcmp.lt.f32.partialorder %v1421, 0.0004427343
        %v1423 = vsel %vm1422, %v1420, %v1417
        %v1424 = vadd.f32 %v1245, 1.0
        %v1425 = vlog2.pop %v1424
        %v1426 = vmul.f32 %v1425, 0.6931472
        %v1427 = vmul.f32 -0.5, %v1245
        %v1428 = vadd.f32 %v1427, 1.0
        %v1429 = vmul.f32 %v1428, %v1245
        %v1430 = vand.u32 2147483647, %v1245
        %vm1431 = vcmp.lt.f32.partialorder %v1430, 0.0004427343
        %v1432 = vsel %vm1431, %v1429, %v1426
        %v1433 = vadd.f32 %v1247, 1.0
        %v1434 = vlog2.pop %v1433
        %v1435 = vmul.f32 %v1434, 0.6931472
        %v1436 = vmul.f32 -0.5, %v1247
        %v1437 = vadd.f32 %v1436, 1.0
        %v1438 = vmul.f32 %v1437, %v1247
        %v1439 = vand.u32 2147483647, %v1247
        %vm1440 = vcmp.lt.f32.partialorder %v1439, 0.0004427343
        %v1441 = vsel %vm1440, %v1438, %v1435
        %v1442 = vadd.f32 %v1249, 1.0
        %v1443 = vlog2.pop %v1442
        %v1444 = vmul.f32 %v1443, 0.6931472
        %v1445 = vmul.f32 -0.5, %v1249
        %v1446 = vadd.f32 %v1445, 1.0
        %v1447 = vmul.f32 %v1446, %v1249
        %v1448 = vand.u32 2147483647, %v1249
        %vm1449 = vcmp.lt.f32.partialorder %v1448, 0.0004427343
        %v1450 = vsel %vm1449, %v1447, %v1444
        %v1451 = vadd.f32 %v1251, 1.0
        %v1452 = vlog2.pop %v1451
        %v1453 = vmul.f32 %v1452, 0.6931472
        %v1454 = vmul.f32 -0.5, %v1251
        %v1455 = vadd.f32 %v1454, 1.0
        %v1456 = vmul.f32 %v1455, %v1251
        %v1457 = vand.u32 2147483647, %v1251
        %vm1458 = vcmp.lt.f32.partialorder %v1457, 0.0004427343
        %v1459 = vsel %vm1458, %v1456, %v1453
        %v1460 = vadd.f32 %v1253, 1.0
        %v1461 = vlog2.pop %v1460
        %v1462 = vmul.f32 %v1461, 0.6931472
        %v1463 = vmul.f32 -0.5, %v1253
        %v1464 = vadd.f32 %v1463, 1.0
        %v1465 = vmul.f32 %v1464, %v1253
        %v1466 = vand.u32 2147483647, %v1253
        %vm1467 = vcmp.lt.f32.partialorder %v1466, 0.0004427343
        %v1468 = vsel %vm1467, %v1465, %v1462
        %v1469 = vadd.f32 %v1255, 1.0
        %v1470 = vlog2.pop %v1469
        %v1471 = vmul.f32 %v1470, 0.6931472
        %v1472 = vmul.f32 -0.5, %v1255
        %v1473 = vadd.f32 %v1472, 1.0
        %v1474 = vmul.f32 %v1473, %v1255
        %v1475 = vand.u32 2147483647, %v1255
        %vm1476 = vcmp.lt.f32.partialorder %v1475, 0.0004427343
        %v1477 = vsel %vm1476, %v1474, %v1471
        %v1478 = vadd.f32 %v1257, 1.0
        %v1479 = vlog2.pop %v1478
        %v1480 = vmul.f32 %v1479, 0.6931472
        %v1481 = vmul.f32 -0.5, %v1257
        %v1482 = vadd.f32 %v1481, 1.0
        %v1483 = vmul.f32 %v1482, %v1257
        %v1484 = vand.u32 2147483647, %v1257
        %vm1485 = vcmp.lt.f32.partialorder %v1484, 0.0004427343
        %v1486 = vsel %vm1485, %v1483, %v1480
        %v1487 = vadd.f32 %v1259, 1.0
        %v1488 = vlog2.pop %v1487
        %v1489 = vmul.f32 %v1488, 0.6931472
        %v1490 = vmul.f32 -0.5, %v1259
        %v1491 = vadd.f32 %v1490, 1.0
        %v1492 = vmul.f32 %v1491, %v1259
        %v1493 = vand.u32 2147483647, %v1259
        %vm1494 = vcmp.lt.f32.partialorder %v1493, 0.0004427343
        %v1495 = vsel %vm1494, %v1492, %v1489
        %v1496 = vadd.f32 %v1261, 1.0
        %v1497 = vlog2.pop %v1496
        %v1498 = vmul.f32 %v1497, 0.6931472
        %v1499 = vmul.f32 -0.5, %v1261
        %v1500 = vadd.f32 %v1499, 1.0
        %v1501 = vmul.f32 %v1500, %v1261
        %v1502 = vand.u32 2147483647, %v1261
        %vm1503 = vcmp.lt.f32.partialorder %v1502, 0.0004427343
        %v1504 = vsel %vm1503, %v1501, %v1498
        %v1505 = vadd.f32 %v1263, 1.0
        %v1506 = vlog2.pop %v1505
        %v1507 = vmul.f32 %v1506, 0.6931472
        %v1508 = vmul.f32 -0.5, %v1263
        %v1509 = vadd.f32 %v1508, 1.0
        %v1510 = vmul.f32 %v1509, %v1263
        %v1511 = vand.u32 2147483647, %v1263
        %vm1512 = vcmp.lt.f32.partialorder %v1511, 0.0004427343
        %v1513 = vsel %vm1512, %v1510, %v1507
        %v1514 = vadd.f32 %v1265, 1.0
        %v1515 = vlog2.pop %v1514
        %v1516 = vmul.f32 %v1515, 0.6931472
        %v1517 = vmul.f32 -0.5, %v1265
        %v1518 = vadd.f32 %v1517, 1.0
        %v1519 = vmul.f32 %v1518, %v1265
        %v1520 = vand.u32 2147483647, %v1265
        %vm1521 = vcmp.lt.f32.partialorder %v1520, 0.0004427343
        %v1522 = vsel %vm1521, %v1519, %v1516
        %v1523 = vadd.f32 %v1267, 1.0
        %v1524 = vlog2.pop %v1523
        %v1525 = vmul.f32 %v1524, 0.6931472
        %v1526 = vmul.f32 -0.5, %v1267
        %v1527 = vadd.f32 %v1526, 1.0
        %v1528 = vmul.f32 %v1527, %v1267
        %v1529 = vand.u32 2147483647, %v1267
        %vm1530 = vcmp.lt.f32.partialorder %v1529, 0.0004427343
        %v1531 = vsel %vm1530, %v1528, %v1525
        %v1532 = vadd.f32 %v1269, 1.0
        %v1533 = vlog2.pop %v1532
        %v1534 = vmul.f32 %v1533, 0.6931472
        %v1535 = vmul.f32 -0.5, %v1269
        %v1536 = vadd.f32 %v1535, 1.0
        %v1537 = vmul.f32 %v1536, %v1269
        %v1538 = vand.u32 2147483647, %v1269
        %vm1539 = vcmp.lt.f32.partialorder %v1538, 0.0004427343
        %v1540 = vsel %vm1539, %v1537, %v1534
        %v1541 = vadd.f32 %v1271, 1.0
        %v1542 = vlog2.pop %v1541
        %v1543 = vmul.f32 %v1542, 0.6931472
        %v1544 = vmul.f32 -0.5, %v1271
        %v1545 = vadd.f32 %v1544, 1.0
        %v1546 = vmul.f32 %v1545, %v1271
        %v1547 = vand.u32 2147483647, %v1271
        %vm1548 = vcmp.lt.f32.partialorder %v1547, 0.0004427343
        %v1549 = vsel %vm1548, %v1546, %v1543
        %v1550 = vadd.f32 %v1273, 1.0
        %v1551 = vlog2.pop %v1550
        %v1552 = vmul.f32 %v1551, 0.6931472
        %v1553 = vmul.f32 -0.5, %v1273
        %v1554 = vadd.f32 %v1553, 1.0
        %v1555 = vmul.f32 %v1554, %v1273
        %v1556 = vand.u32 2147483647, %v1273
        %vm1557 = vcmp.lt.f32.partialorder %v1556, 0.0004427343
        %v1558 = vsel %vm1557, %v1555, %v1552
        %v1559 = vadd.f32 %v1275, 1.0
        %v1560 = vlog2.pop %v1559
        %v1561 = vmul.f32 %v1560, 0.6931472
        %v1562 = vmul.f32 -0.5, %v1275
        %v1563 = vadd.f32 %v1562, 1.0
        %v1564 = vmul.f32 %v1563, %v1275
        %v1565 = vand.u32 2147483647, %v1275
        %vm1566 = vcmp.lt.f32.partialorder %v1565, 0.0004427343
        %v1567 = vsel %vm1566, %v1564, %v1561
        %v1568 = vadd.f32 %v1277, 1.0
        %v1569 = vlog2.pop %v1568
        %v1570 = vmul.f32 %v1569, 0.6931472
        %v1571 = vmul.f32 -0.5, %v1277
        %v1572 = vadd.f32 %v1571, 1.0
        %v1573 = vmul.f32 %v1572, %v1277
        %v1574 = vand.u32 2147483647, %v1277
        %vm1575 = vcmp.lt.f32.partialorder %v1574, 0.0004427343
        %v1576 = vsel %vm1575, %v1573, %v1570
        %v1577 = vadd.f32 %v1279, 1.0
        %v1578 = vlog2.pop %v1577
        %v1579 = vmul.f32 %v1578, 0.6931472
        %v1580 = vmul.f32 -0.5, %v1279
        %v1581 = vadd.f32 %v1580, 1.0
        %v1582 = vmul.f32 %v1581, %v1279
        %v1583 = vand.u32 2147483647, %v1279
        %vm1584 = vcmp.lt.f32.partialorder %v1583, 0.0004427343
        %v1585 = vsel %vm1584, %v1582, %v1579
        %v1586 = vadd.f32 %v1281, 1.0
        %v1587 = vlog2.pop %v1586
        %v1588 = vmul.f32 %v1587, 0.6931472
        %v1589 = vmul.f32 -0.5, %v1281
        %v1590 = vadd.f32 %v1589, 1.0
        %v1591 = vmul.f32 %v1590, %v1281
        %v1592 = vand.u32 2147483647, %v1281
        %vm1593 = vcmp.lt.f32.partialorder %v1592, 0.0004427343
        %v1594 = vsel %vm1593, %v1591, %v1588
        %v1595 = vadd.f32 %v1283, 1.0
        %v1596 = vlog2.pop %v1595
        %v1597 = vmul.f32 %v1596, 0.6931472
        %v1598 = vmul.f32 -0.5, %v1283
        %v1599 = vadd.f32 %v1598, 1.0
        %v1600 = vmul.f32 %v1599, %v1283
        %v1601 = vand.u32 2147483647, %v1283
        %vm1602 = vcmp.lt.f32.partialorder %v1601, 0.0004427343
        %v1603 = vsel %vm1602, %v1600, %v1597
        %v1604 = vadd.f32 %v1285, 1.0
        %v1605 = vlog2.pop %v1604
        %v1606 = vmul.f32 %v1605, 0.6931472
        %v1607 = vmul.f32 -0.5, %v1285
        %v1608 = vadd.f32 %v1607, 1.0
        %v1609 = vmul.f32 %v1608, %v1285
        %v1610 = vand.u32 2147483647, %v1285
        %vm1611 = vcmp.lt.f32.partialorder %v1610, 0.0004427343
        %v1612 = vsel %vm1611, %v1609, %v1606
        %v1613 = vadd.f32 %v1287, 1.0
        %v1614 = vlog2.pop %v1613
        %v1615 = vmul.f32 %v1614, 0.6931472
        %v1616 = vmul.f32 -0.5, %v1287
        %v1617 = vadd.f32 %v1616, 1.0
        %v1618 = vmul.f32 %v1617, %v1287
        %v1619 = vand.u32 2147483647, %v1287
        %vm1620 = vcmp.lt.f32.partialorder %v1619, 0.0004427343
        %v1621 = vsel %vm1620, %v1618, %v1615
        %v1622 = vadd.f32 %v1289, 1.0
        %v1623 = vlog2.pop %v1622
        %v1624 = vmul.f32 %v1623, 0.6931472
        %v1625 = vmul.f32 -0.5, %v1289
        %v1626 = vadd.f32 %v1625, 1.0
        %v1627 = vmul.f32 %v1626, %v1289
        %v1628 = vand.u32 2147483647, %v1289
        %vm1629 = vcmp.lt.f32.partialorder %v1628, 0.0004427343
        %v1630 = vsel %vm1629, %v1627, %v1624
        %v1631 = vadd.f32 %v1291, 1.0
        %v1632 = vlog2.pop %v1631
        %v1633 = vmul.f32 %v1632, 0.6931472
        %v1634 = vmul.f32 -0.5, %v1291
        %v1635 = vadd.f32 %v1634, 1.0
        %v1636 = vmul.f32 %v1635, %v1291
        %v1637 = vand.u32 2147483647, %v1291
        %vm1638 = vcmp.lt.f32.partialorder %v1637, 0.0004427343
        %v1639 = vsel %vm1638, %v1636, %v1633
        %v1640 = vadd.f32 %v1293, 1.0
        %v1641 = vlog2.pop %v1640
        %v1642 = vmul.f32 %v1641, 0.6931472
        %v1643 = vmul.f32 -0.5, %v1293
        %v1644 = vadd.f32 %v1643, 1.0
        %v1645 = vmul.f32 %v1644, %v1293
        %v1646 = vand.u32 2147483647, %v1293
        %vm1647 = vcmp.lt.f32.partialorder %v1646, 0.0004427343
        %v1648 = vsel %vm1647, %v1645, %v1642
        %v1649 = vadd.f32 %v1295, 1.0
        %v1650 = vlog2.pop %v1649
        %v1651 = vmul.f32 %v1650, 0.6931472
        %v1652 = vmul.f32 -0.5, %v1295
        %v1653 = vadd.f32 %v1652, 1.0
        %v1654 = vmul.f32 %v1653, %v1295
        %v1655 = vand.u32 2147483647, %v1295
        %vm1656 = vcmp.lt.f32.partialorder %v1655, 0.0004427343
        %v1657 = vsel %vm1656, %v1654, %v1651
        %v1658 = vadd.f32 %v1297, 1.0
        %v1659 = vlog2.pop %v1658
        %v1660 = vmul.f32 %v1659, 0.6931472
        %v1661 = vmul.f32 -0.5, %v1297
        %v1662 = vadd.f32 %v1661, 1.0
        %v1663 = vmul.f32 %v1662, %v1297
        %v1664 = vand.u32 2147483647, %v1297
        %vm1665 = vcmp.lt.f32.partialorder %v1664, 0.0004427343
        %v1666 = vsel %vm1665, %v1663, %v1660
        %v1667 = vadd.f32 %v1299, 1.0
        %v1668 = vlog2.pop %v1667
        %v1669 = vmul.f32 %v1668, 0.6931472
        %v1670 = vmul.f32 -0.5, %v1299
        %v1671 = vadd.f32 %v1670, 1.0
        %v1672 = vmul.f32 %v1671, %v1299
        %v1673 = vand.u32 2147483647, %v1299
        %vm1674 = vcmp.lt.f32.partialorder %v1673, 0.0004427343
        %v1675 = vsel %vm1674, %v1672, %v1669
        %v1676 = vadd.f32 %v1301, 1.0
        %v1677 = vlog2.pop %v1676
        %v1678 = vmul.f32 %v1677, 0.6931472
        %v1679 = vmul.f32 -0.5, %v1301
        %v1680 = vadd.f32 %v1679, 1.0
        %v1681 = vmul.f32 %v1680, %v1301
        %v1682 = vand.u32 2147483647, %v1301
        %vm1683 = vcmp.lt.f32.partialorder %v1682, 0.0004427343
        %v1684 = vsel %vm1683, %v1681, %v1678
        %v1685 = vadd.f32 %v1303, 1.0
        %v1686 = vlog2.pop %v1685
        %v1687 = vmul.f32 %v1686, 0.6931472
        %v1688 = vmul.f32 -0.5, %v1303
        %v1689 = vadd.f32 %v1688, 1.0
        %v1690 = vmul.f32 %v1689, %v1303
        %v1691 = vand.u32 2147483647, %v1303
        %vm1692 = vcmp.lt.f32.partialorder %v1691, 0.0004427343
        %v1693 = vsel %vm1692, %v1690, %v1687
        %v1694 = vadd.f32 %v1305, 1.0
        %v1695 = vlog2.pop %v1694
        %v1696 = vmul.f32 %v1695, 0.6931472
        %v1697 = vmul.f32 -0.5, %v1305
        %v1698 = vadd.f32 %v1697, 1.0
        %v1699 = vmul.f32 %v1698, %v1305
        %v1700 = vand.u32 2147483647, %v1305
        %vm1701 = vcmp.lt.f32.partialorder %v1700, 0.0004427343
        %v1702 = vsel %vm1701, %v1699, %v1696
        %v1703 = vadd.f32 %v1307, 1.0
        %v1704 = vlog2.pop %v1703
        %v1705 = vmul.f32 %v1704, 0.6931472
        %v1706 = vmul.f32 -0.5, %v1307
        %v1707 = vadd.f32 %v1706, 1.0
        %v1708 = vmul.f32 %v1707, %v1307
        %v1709 = vand.u32 2147483647, %v1307
        %vm1710 = vcmp.lt.f32.partialorder %v1709, 0.0004427343
        %v1711 = vsel %vm1710, %v1708, %v1705
        %v1712 = vadd.f32 %v1309, 1.0
        %v1713 = vlog2.pop %v1712
        %v1714 = vmul.f32 %v1713, 0.6931472
        %v1715 = vmul.f32 -0.5, %v1309
        %v1716 = vadd.f32 %v1715, 1.0
        %v1717 = vmul.f32 %v1716, %v1309
        %v1718 = vand.u32 2147483647, %v1309
        %vm1719 = vcmp.lt.f32.partialorder %v1718, 0.0004427343
        %v1720 = vsel %vm1719, %v1717, %v1714
        %v1721 = vadd.f32 %v1311, 1.0
        %v1722 = vlog2.pop %v1721
        %v1723 = vmul.f32 %v1722, 0.6931472
        %v1724 = vmul.f32 -0.5, %v1311
        %v1725 = vadd.f32 %v1724, 1.0
        %v1726 = vmul.f32 %v1725, %v1311
        %v1727 = vand.u32 2147483647, %v1311
        %vm1728 = vcmp.lt.f32.partialorder %v1727, 0.0004427343
        %v1729 = vsel %vm1728, %v1726, %v1723
        %v1730 = vadd.f32 %v1313, 1.0
        %v1731 = vlog2.pop %v1730
        %v1732 = vmul.f32 %v1731, 0.6931472
        %v1733 = vmul.f32 -0.5, %v1313
        %v1734 = vadd.f32 %v1733, 1.0
        %v1735 = vmul.f32 %v1734, %v1313
        %v1736 = vand.u32 2147483647, %v1313
        %vm1737 = vcmp.lt.f32.partialorder %v1736, 0.0004427343
        %v1738 = vsel %vm1737, %v1735, %v1732
        %v1739 = vadd.f32 %v1315, 1.0
        %v1740 = vlog2.pop %v1739
        %v1741 = vmul.f32 %v1740, 0.6931472
        %v1742 = vmul.f32 -0.5, %v1315
        %v1743 = vadd.f32 %v1742, 1.0
        %v1744 = vmul.f32 %v1743, %v1315
        %v1745 = vand.u32 2147483647, %v1315
        %vm1746 = vcmp.lt.f32.partialorder %v1745, 0.0004427343
        %v1747 = vsel %vm1746, %v1744, %v1741
        %v1748 = vadd.f32 %v1076, %v1324
        %v1749 = vadd.f32 %v1077, %v1333
        %v1750 = vadd.f32 %v1078, %v1342
        %v1751 = vadd.f32 %v1079, %v1351
        %v1752 = vadd.f32 %v1080, %v1360
        %v1753 = vadd.f32 %v1081, %v1369
        %v1754 = vadd.f32 %v1082, %v1378
        %v1755 = vadd.f32 %v1083, %v1387
        %v1756 = vadd.f32 %v1084, %v1396
        %v1757 = vadd.f32 %v1085, %v1405
        %v1758 = vadd.f32 %v1086, %v1414
        %v1759 = vadd.f32 %v1087, %v1423
        %v1760 = vadd.f32 %v1088, %v1432
        %v1761 = vadd.f32 %v1089, %v1441
        %v1762 = vadd.f32 %v1090, %v1450
        %v1763 = vadd.f32 %v1091, %v1459
        %v1764 = vadd.f32 %v1092, %v1468
        %v1765 = vadd.f32 %v1093, %v1477
        %v1766 = vadd.f32 %v1094, %v1486
        %v1767 = vadd.f32 %v1095, %v1495
        %v1768 = vadd.f32 %v1096, %v1504
        %v1769 = vadd.f32 %v1097, %v1513
        %v1770 = vadd.f32 %v1098, %v1522
        %v1771 = vadd.f32 %v1099, %v1531
        %v1772 = vadd.f32 %v1100, %v1540
        %v1773 = vadd.f32 %v1101, %v1549
        %v1774 = vadd.f32 %v1102, %v1558
        %v1775 = vadd.f32 %v1103, %v1567
        %v1776 = vadd.f32 %v1104, %v1576
        %v1777 = vadd.f32 %v1105, %v1585
        %v1778 = vadd.f32 %v1106, %v1594
        %v1779 = vadd.f32 %v1107, %v1603
        %v1780 = vadd.f32 %v1108, %v1612
        %v1781 = vadd.f32 %v1109, %v1621
        %v1782 = vadd.f32 %v1110, %v1630
        %v1783 = vadd.f32 %v1111, %v1639
        %v1784 = vadd.f32 %v1112, %v1648
        %v1785 = vadd.f32 %v1113, %v1657
        %v1786 = vadd.f32 %v1114, %v1666
        %v1787 = vadd.f32 %v1115, %v1675
        %v1788 = vadd.f32 %v1116, %v1684
        %v1789 = vadd.f32 %v1117, %v1693
        %v1790 = vadd.f32 %v1118, %v1702
        %v1791 = vadd.f32 %v1119, %v1711
        %v1792 = vadd.f32 %v1120, %v1720
        %v1793 = vadd.f32 %v1121, %v1729
        %v1794 = vadd.f32 %v1122, %v1738
        %v1795 = vadd.f32 %v1123, %v1747
        %v1796 = vld [vmem:[%s949] sm:$0xff]
        %v1797 = vld [vmem:[%s949 + $0x8] sm:$0xff]
        %v1798 = vld [vmem:[%s949 + $0x10] sm:$0xff]
        %v1799 = vld [vmem:[%s949 + $0x18] sm:$0xff]
        %v1800 = vld [vmem:[%s949 + $0x20] sm:$0xff]
        %v1801 = vld [vmem:[%s949 + $0x28] sm:$0xff]
        %v1802 = vld [vmem:[%s949 + $0x30] sm:$0xff]
        %v1803 = vld [vmem:[%s949 + $0x38] sm:$0xff]
        %v1804 = vld [vmem:[%s949 + $0x40] sm:$0xff]
        %v1805 = vld [vmem:[%s949 + $0x48] sm:$0xff]
        %v1806 = vld [vmem:[%s949 + $0x50] sm:$0xff]
        %v1807 = vld [vmem:[%s949 + $0x58] sm:$0xff]
        %v1808 = vld [vmem:[%s949 + $0x60] sm:$0xff]
        %v1809 = vld [vmem:[%s949 + $0x68] sm:$0xff]
        %v1810 = vld [vmem:[%s949 + $0x70] sm:$0xff]
        %v1811 = vld [vmem:[%s949 + $0x78] sm:$0xff]
        %v1812 = vld [vmem:[%s949 + $0x80] sm:$0xff]
        %v1813 = vld [vmem:[%s949 + $0x88] sm:$0xff]
        %v1814 = vld [vmem:[%s949 + $0x90] sm:$0xff]
        %v1815 = vld [vmem:[%s949 + $0x98] sm:$0xff]
        %v1816 = vld [vmem:[%s949 + $0xa0] sm:$0xff]
        %v1817 = vld [vmem:[%s949 + $0xa8] sm:$0xff]
        %v1818 = vld [vmem:[%s949 + $0xb0] sm:$0xff]
        %v1819 = vld [vmem:[%s949 + $0xb8] sm:$0xff]
        %v1820 = vld [vmem:[%s949 + $0xc0] sm:$0xff]
        %v1821 = vld [vmem:[%s949 + $0xc8] sm:$0xff]
        %v1822 = vld [vmem:[%s949 + $0xd0] sm:$0xff]
        %v1823 = vld [vmem:[%s949 + $0xd8] sm:$0xff]
        %v1824 = vld [vmem:[%s949 + $0xe0] sm:$0xff]
        %v1825 = vld [vmem:[%s949 + $0xe8] sm:$0xff]
        %v1826 = vld [vmem:[%s949 + $0xf0] sm:$0xff]
        %v1827 = vld [vmem:[%s949 + $0xf8] sm:$0xff]
        %v1828 = vld [vmem:[%s949 + $0x100] sm:$0xff]
        %v1829 = vld [vmem:[%s949 + $0x108] sm:$0xff]
        %v1830 = vld [vmem:[%s949 + $0x110] sm:$0xff]
        %v1831 = vld [vmem:[%s949 + $0x118] sm:$0xff]
        %v1832 = vld [vmem:[%s949 + $0x120] sm:$0xff]
        %v1833 = vld [vmem:[%s949 + $0x128] sm:$0xff]
        %v1834 = vld [vmem:[%s949 + $0x130] sm:$0xff]
        %v1835 = vld [vmem:[%s949 + $0x138] sm:$0xff]
        %v1836 = vld [vmem:[%s949 + $0x140] sm:$0xff]
        %v1837 = vld [vmem:[%s949 + $0x148] sm:$0xff]
        %v1838 = vld [vmem:[%s949 + $0x150] sm:$0xff]
        %v1839 = vld [vmem:[%s949 + $0x158] sm:$0xff]
        %v1840 = vld [vmem:[%s949 + $0x160] sm:$0xff]
        %v1841 = vld [vmem:[%s949 + $0x168] sm:$0xff]
        %v1842 = vld [vmem:[%s949 + $0x170] sm:$0xff]
        %v1843 = vld [vmem:[%s949 + $0x178] sm:$0xff]
        %v1844 = vld [vmem:[%s963] sm:$0xf]
        %v1845 = vld [vmem:[%s963 + $0x4] sm:$0xf]
        %v1846 = vld [vmem:[%s963 + $0x8] sm:$0xf]
        %v1847 = vld [vmem:[%s963 + $0xc] sm:$0xf]
        %v1848 = vld [vmem:[%s963 + $0x10] sm:$0xf]
        %v1849 = vld [vmem:[%s963 + $0x14] sm:$0xf]
        %v1850 = vld [vmem:[%s963 + $0x18] sm:$0xf]
        %v1851 = vld [vmem:[%s963 + $0x1c] sm:$0xf]
        %v1852 = vld [vmem:[%s963 + $0x20] sm:$0xf]
        %v1853 = vld [vmem:[%s963 + $0x24] sm:$0xf]
        %v1854 = vld [vmem:[%s963 + $0x28] sm:$0xf]
        %v1855 = vld [vmem:[%s963 + $0x2c] sm:$0xf]
        %v1856 = vld [vmem:[%s963 + $0x30] sm:$0xf]
        %v1857 = vld [vmem:[%s963 + $0x34] sm:$0xf]
        %v1858 = vld [vmem:[%s963 + $0x38] sm:$0xf]
        %v1859 = vld [vmem:[%s963 + $0x3c] sm:$0xf]
        %v1860 = vld [vmem:[%s963 + $0x40] sm:$0xf]
        %v1861 = vld [vmem:[%s963 + $0x44] sm:$0xf]
        %v1862 = vld [vmem:[%s963 + $0x48] sm:$0xf]
        %v1863 = vld [vmem:[%s963 + $0x4c] sm:$0xf]
        %v1864 = vld [vmem:[%s963 + $0x50] sm:$0xf]
        %v1865 = vld [vmem:[%s963 + $0x54] sm:$0xf]
        %v1866 = vld [vmem:[%s963 + $0x58] sm:$0xf]
        %v1867 = vld [vmem:[%s963 + $0x5c] sm:$0xf]
        %v1868 = vld [vmem:[%s963 + $0x60] sm:$0xf]
        %v1869 = vld [vmem:[%s963 + $0x64] sm:$0xf]
        %v1870 = vld [vmem:[%s963 + $0x68] sm:$0xf]
        %v1871 = vld [vmem:[%s963 + $0x6c] sm:$0xf]
        %v1872 = vld [vmem:[%s963 + $0x70] sm:$0xf]
        %v1873 = vld [vmem:[%s963 + $0x74] sm:$0xf]
        %v1874 = vld [vmem:[%s963 + $0x78] sm:$0xf]
        %v1875 = vld [vmem:[%s963 + $0x7c] sm:$0xf]
        %v1876 = vld [vmem:[%s963 + $0x80] sm:$0xf]
        %v1877 = vld [vmem:[%s963 + $0x84] sm:$0xf]
        %v1878 = vld [vmem:[%s963 + $0x88] sm:$0xf]
        %v1879 = vld [vmem:[%s963 + $0x8c] sm:$0xf]
        %v1880 = vld [vmem:[%s963 + $0x90] sm:$0xf]
        %v1881 = vld [vmem:[%s963 + $0x94] sm:$0xf]
        %v1882 = vld [vmem:[%s963 + $0x98] sm:$0xf]
        %v1883 = vld [vmem:[%s963 + $0x9c] sm:$0xf]
        %v1884 = vld [vmem:[%s963 + $0xa0] sm:$0xf]
        %v1885 = vld [vmem:[%s963 + $0xa4] sm:$0xf]
        %v1886 = vld [vmem:[%s963 + $0xa8] sm:$0xf]
        %v1887 = vld [vmem:[%s963 + $0xac] sm:$0xf]
        %v1888 = vld [vmem:[%s963 + $0xb0] sm:$0xf]
        %v1889 = vld [vmem:[%s963 + $0xb4] sm:$0xf]
        %v1890 = vld [vmem:[%s963 + $0xb8] sm:$0xf]
        %v1891 = vld [vmem:[%s963 + $0xbc] sm:$0xf]
        %v1892 = vunpack.c.l.bf16 %v1844
        %v1893 = vunpack.c.l.bf16 %v1845
        %v1894 = vunpack.c.l.bf16 %v1846
        %v1895 = vunpack.c.l.bf16 %v1847
        %v1896 = vunpack.c.l.bf16 %v1848
        %v1897 = vunpack.c.l.bf16 %v1849
        %v1898 = vunpack.c.l.bf16 %v1850
        %v1899 = vunpack.c.l.bf16 %v1851
        %v1900 = vunpack.c.l.bf16 %v1852
        %v1901 = vunpack.c.l.bf16 %v1853
        %v1902 = vunpack.c.l.bf16 %v1854
        %v1903 = vunpack.c.l.bf16 %v1855
        %v1904 = vunpack.c.l.bf16 %v1856
        %v1905 = vunpack.c.l.bf16 %v1857
        %v1906 = vunpack.c.l.bf16 %v1858
        %v1907 = vunpack.c.l.bf16 %v1859
        %v1908 = vunpack.c.l.bf16 %v1860
        %v1909 = vunpack.c.l.bf16 %v1861
        %v1910 = vunpack.c.l.bf16 %v1862
        %v1911 = vunpack.c.l.bf16 %v1863
        %v1912 = vunpack.c.l.bf16 %v1864
        %v1913 = vunpack.c.l.bf16 %v1865
        %v1914 = vunpack.c.l.bf16 %v1866
        %v1915 = vunpack.c.l.bf16 %v1867
        %v1916 = vunpack.c.l.bf16 %v1868
        %v1917 = vunpack.c.l.bf16 %v1869
        %v1918 = vunpack.c.l.bf16 %v1870
        %v1919 = vunpack.c.l.bf16 %v1871
        %v1920 = vunpack.c.l.bf16 %v1872
        %v1921 = vunpack.c.l.bf16 %v1873
        %v1922 = vunpack.c.l.bf16 %v1874
        %v1923 = vunpack.c.l.bf16 %v1875
        %v1924 = vunpack.c.l.bf16 %v1876
        %v1925 = vunpack.c.l.bf16 %v1877
        %v1926 = vunpack.c.l.bf16 %v1878
        %v1927 = vunpack.c.l.bf16 %v1879
        %v1928 = vunpack.c.l.bf16 %v1880
        %v1929 = vunpack.c.l.bf16 %v1881
        %v1930 = vunpack.c.l.bf16 %v1882
        %v1931 = vunpack.c.l.bf16 %v1883
        %v1932 = vunpack.c.l.bf16 %v1884
        %v1933 = vunpack.c.l.bf16 %v1885
        %v1934 = vunpack.c.l.bf16 %v1886
        %v1935 = vunpack.c.l.bf16 %v1887
        %v1936 = vunpack.c.l.bf16 %v1888
        %v1937 = vunpack.c.l.bf16 %v1889
        %v1938 = vunpack.c.l.bf16 %v1890
        %v1939 = vunpack.c.l.bf16 %v1891
        %v1940 = vmul.f32 %v1748, %v1892
        %v1941 = vmul.f32 %v1749, %v1893
        %v1942 = vmul.f32 %v1750, %v1894
        %v1943 = vmul.f32 %v1751, %v1895
        %v1944 = vmul.f32 %v1752, %v1896
        %v1945 = vmul.f32 %v1753, %v1897
        %v1946 = vmul.f32 %v1754, %v1898
        %v1947 = vmul.f32 %v1755, %v1899
        %v1948 = vmul.f32 %v1756, %v1900
        %v1949 = vmul.f32 %v1757, %v1901
        %v1950 = vmul.f32 %v1758, %v1902
        %v1951 = vmul.f32 %v1759, %v1903
        %v1952 = vmul.f32 %v1760, %v1904
        %v1953 = vmul.f32 %v1761, %v1905
        %v1954 = vmul.f32 %v1762, %v1906
        %v1955 = vmul.f32 %v1763, %v1907
        %v1956 = vmul.f32 %v1764, %v1908
        %v1957 = vmul.f32 %v1765, %v1909
        %v1958 = vmul.f32 %v1766, %v1910
        %v1959 = vmul.f32 %v1767, %v1911
        %v1960 = vmul.f32 %v1768, %v1912
        %v1961 = vmul.f32 %v1769, %v1913
        %v1962 = vmul.f32 %v1770, %v1914
        %v1963 = vmul.f32 %v1771, %v1915
        %v1964 = vmul.f32 %v1772, %v1916
        %v1965 = vmul.f32 %v1773, %v1917
        %v1966 = vmul.f32 %v1774, %v1918
        %v1967 = vmul.f32 %v1775, %v1919
        %v1968 = vmul.f32 %v1776, %v1920
        %v1969 = vmul.f32 %v1777, %v1921
        %v1970 = vmul.f32 %v1778, %v1922
        %v1971 = vmul.f32 %v1779, %v1923
        %v1972 = vmul.f32 %v1780, %v1924
        %v1973 = vmul.f32 %v1781, %v1925
        %v1974 = vmul.f32 %v1782, %v1926
        %v1975 = vmul.f32 %v1783, %v1927
        %v1976 = vmul.f32 %v1784, %v1928
        %v1977 = vmul.f32 %v1785, %v1929
        %v1978 = vmul.f32 %v1786, %v1930
        %v1979 = vmul.f32 %v1787, %v1931
        %v1980 = vmul.f32 %v1788, %v1932
        %v1981 = vmul.f32 %v1789, %v1933
        %v1982 = vmul.f32 %v1790, %v1934
        %v1983 = vmul.f32 %v1791, %v1935
        %v1984 = vmul.f32 %v1792, %v1936
        %v1985 = vmul.f32 %v1793, %v1937
        %v1986 = vmul.f32 %v1794, %v1938
        %v1987 = vmul.f32 %v1795, %v1939
        %v1988 = vadd.f32 %v1796, %v1940
        %v1989 = vadd.f32 %v1797, %v1941
        %v1990 = vadd.f32 %v1798, %v1942
        %v1991 = vadd.f32 %v1799, %v1943
        %v1992 = vadd.f32 %v1800, %v1944
        %v1993 = vadd.f32 %v1801, %v1945
        %v1994 = vadd.f32 %v1802, %v1946
        %v1995 = vadd.f32 %v1803, %v1947
        %v1996 = vadd.f32 %v1804, %v1948
        %v1997 = vadd.f32 %v1805, %v1949
        %v1998 = vadd.f32 %v1806, %v1950
        %v1999 = vadd.f32 %v1807, %v1951
        %v2000 = vadd.f32 %v1808, %v1952
        %v2001 = vadd.f32 %v1809, %v1953
        %v2002 = vadd.f32 %v1810, %v1954
        %v2003 = vadd.f32 %v1811, %v1955
        %v2004 = vadd.f32 %v1812, %v1956
        %v2005 = vadd.f32 %v1813, %v1957
        %v2006 = vadd.f32 %v1814, %v1958
        %v2007 = vadd.f32 %v1815, %v1959
        %v2008 = vadd.f32 %v1816, %v1960
        %v2009 = vadd.f32 %v1817, %v1961
        %v2010 = vadd.f32 %v1818, %v1962
        %v2011 = vadd.f32 %v1819, %v1963
        %v2012 = vadd.f32 %v1820, %v1964
        %v2013 = vadd.f32 %v1821, %v1965
        %v2014 = vadd.f32 %v1822, %v1966
        %v2015 = vadd.f32 %v1823, %v1967
        %v2016 = vadd.f32 %v1824, %v1968
        %v2017 = vadd.f32 %v1825, %v1969
        %v2018 = vadd.f32 %v1826, %v1970
        %v2019 = vadd.f32 %v1827, %v1971
        %v2020 = vadd.f32 %v1828, %v1972
        %v2021 = vadd.f32 %v1829, %v1973
        %v2022 = vadd.f32 %v1830, %v1974
        %v2023 = vadd.f32 %v1831, %v1975
        %v2024 = vadd.f32 %v1832, %v1976
        %v2025 = vadd.f32 %v1833, %v1977
        %v2026 = vadd.f32 %v1834, %v1978
        %v2027 = vadd.f32 %v1835, %v1979
        %v2028 = vadd.f32 %v1836, %v1980
        %v2029 = vadd.f32 %v1837, %v1981
        %v2030 = vadd.f32 %v1838, %v1982
        %v2031 = vadd.f32 %v1839, %v1983
        %v2032 = vadd.f32 %v1840, %v1984
        %v2033 = vadd.f32 %v1841, %v1985
        %v2034 = vadd.f32 %v1842, %v1986
        %v2035 = vadd.f32 %v1843, %v1987
        %v2036 = vpack.c.bf16 %v1989, %v1988
        %v2037 = vpack.c.bf16 %v1991, %v1990
        %v2038 = vpack.c.bf16 %v1993, %v1992
        %v2039 = vpack.c.bf16 %v1995, %v1994
        %v2040 = vpack.c.bf16 %v1997, %v1996
        %v2041 = vpack.c.bf16 %v1999, %v1998
        %v2042 = vpack.c.bf16 %v2001, %v2000
        %v2043 = vpack.c.bf16 %v2003, %v2002
        %v2044 = vpack.c.bf16 %v2005, %v2004
        %v2045 = vpack.c.bf16 %v2007, %v2006
        %v2046 = vpack.c.bf16 %v2009, %v2008
        %v2047 = vpack.c.bf16 %v2011, %v2010
        %v2048 = vpack.c.bf16 %v2013, %v2012
        %v2049 = vpack.c.bf16 %v2015, %v2014
        %v2050 = vpack.c.bf16 %v2017, %v2016
        %v2051 = vpack.c.bf16 %v2019, %v2018
        %v2052 = vpack.c.bf16 %v2021, %v2020
        %v2053 = vpack.c.bf16 %v2023, %v2022
        %v2054 = vpack.c.bf16 %v2025, %v2024
        %v2055 = vpack.c.bf16 %v2027, %v2026
        %v2056 = vpack.c.bf16 %v2029, %v2028
        %v2057 = vpack.c.bf16 %v2031, %v2030
        %v2058 = vpack.c.bf16 %v2033, %v2032
        %v2059 = vpack.c.bf16 %v2035, %v2034
        %v2060 = vld [vmem:[%s1017] sm:$0xff]
        %v2061 = vld [vmem:[%s1017 + $0x8] sm:$0xf]
        %v2062 = vld [vmem:[%s1017 + $0xc] sm:$0xff]
        %v2063 = vld [vmem:[%s1017 + $0x14] sm:$0xf]
        %v2064 = vld [vmem:[%s1017 + $0x18] sm:$0xff]
        %v2065 = vld [vmem:[%s1017 + $0x20] sm:$0xf]
        %v2066 = vld [vmem:[%s1017 + $0x24] sm:$0xff]
        %v2067 = vld [vmem:[%s1017 + $0x2c] sm:$0xf]
        %v2068 = vld [vmem:[%s1025] sm:$0x1]
        %v2070 = vlaneseq
        %v2071 = vshrl.u32 %v2070, 7
        %v2072 = vsub.s32 0, %v2071
        %v2073 = vrot.slane %v2068, %v2072
        %v2083 = vunpack.c.l.b16 %v2060
        %v2084 = vunpack.c.h.b16 %v2060
        %v2085 = vunpack.c.l.b16 %v2061
        %v2086 = vunpack.c.l.b16 %v2062
        %v2087 = vunpack.c.h.b16 %v2062
        %v2088 = vunpack.c.l.b16 %v2063
        %v2089 = vunpack.c.l.b16 %v2064
        %v2090 = vunpack.c.h.b16 %v2064
        %v2091 = vunpack.c.l.b16 %v2065
        %v2092 = vunpack.c.l.b16 %v2066
        %v2093 = vunpack.c.h.b16 %v2066
        %v2094 = vunpack.c.l.b16 %v2067
        %v2095 = vpack.c.b16 %v2086, %v2083
        %v2096 = vpack.c.b16 %v2087, %v2084
        %v2097 = vpack.c.b16 %v2088, %v2085
        %v2098 = vpack.c.b16 %v2092, %v2089
        %v2099 = vpack.c.b16 %v2093, %v2090
        %v2100 = vpack.c.b16 %v2094, %v2091
        %2107 = vmatprep.subr.bf16.mxu0 0
        %2108 = vmatpush1.bf16.msra.mxu0 %v2036
        %2109 = vmatprep.subr.bf16.mxu0 0
        %2110 = vmatpush1.bf16.msra.mxu0 %v2037
        %2111 = vmatprep.subr.bf16.mxu0 0
        %2112 = vmatpush1.bf16.msra.mxu0 %v2038
        %2113 = vmatprep.subr.bf16.mxu0 0
        %2114 = vmatpush1.bf16.msra.mxu0 %v2039
        %2115 = vmatprep.subr.bf16.mxu0 0
        %2116 = vmatpush1.bf16.msra.mxu0 %v2040
        %2117 = vmatprep.subr.bf16.mxu0 0
        %2118 = vmatpush1.bf16.msra.mxu0 %v2041
        %2119 = vmatprep.subr.bf16.mxu0 0
        %2120 = vmatpush1.bf16.msra.mxu0 %v2042
        %2121 = vmatprep.subr.bf16.mxu0 0
        %2122 = vmatpush1.bf16.msra.mxu0 %v2043
        %2123 = vmatprep.subr.bf16.mxu0 0
        %2124 = vmatpush1.bf16.msra.mxu0 %v2044
        %2125 = vmatprep.subr.bf16.mxu0 0
        %2126 = vmatpush1.bf16.msra.mxu0 %v2045
        %2127 = vmatprep.subr.bf16.mxu0 0
        %2128 = vmatpush1.bf16.msra.mxu0 %v2046
        %2129 = vmatprep.subr.bf16.mxu0 0
        %2130 = vmatpush1.bf16.msra.mxu0 %v2047
        %2131 = vmatprep.subr.bf16.mxu0 0
        %2132 = vmatpush1.bf16.msra.mxu0 %v2048
        %2133 = vmatprep.subr.bf16.mxu0 0
        %2134 = vmatpush1.bf16.msra.mxu0 %v2049
        %2135 = vmatprep.subr.bf16.mxu0 0
        %2136 = vmatpush1.bf16.msra.mxu0 %v2050
        %2137 = vmatprep.subr.bf16.mxu0 0
        %2138 = vmatpush1.bf16.msra.mxu0 %v2051
        %2139 = vmatprep.mubr.bf16.mxu0 %v2096
        %2140 = vmatmul.mubr.bf16.gmra.mrb[0].mxu0 %v2095
        %v2141 = vpop.f32.mrb[0].mxu0
        %v2142 = vadd.f32 %v2073, %v2141
        %v2143 = vpop.f32.mrb[0].mxu0
        %v2144 = vpop.f32.mrb[0].mxu0
        %v2145 = vadd.f32 %v2073, %v2144
        %v2146 = vpop.f32.mrb[0].mxu0
        %2147 = vmatprep.mubr.bf16.mxu0 %v2099
        %2148 = vmatmul.mubr.bf16.gmra.mrb[0].mxu0 %v2098
        %v2149 = vpop.f32.mrb[0].mxu0
        %v2150 = vadd.f32 %v2073, %v2149
        %v2151 = vpop.f32.mrb[0].mxu0
        %v2152 = vpop.f32.mrb[0].mxu0
        %v2153 = vadd.f32 %v2073, %v2152
        %v2154 = vpop.f32.mrb[0].mxu0
        %2155 = vdwg.mxu0
        %2156 = vmatprep.subr.bf16.mxu0 0
        %2157 = vmatpush1.bf16.msra.mxu0 %v2052
        %2158 = vmatprep.subr.bf16.mxu0 0
        %2159 = vmatpush1.bf16.msra.mxu0 %v2053
        %2160 = vmatprep.subr.bf16.mxu0 0
        %2161 = vmatpush1.bf16.msra.mxu0 %v2054
        %2162 = vmatprep.subr.bf16.mxu0 0
        %2163 = vmatpush1.bf16.msra.mxu0 %v2055
        %2164 = vmatprep.subr.bf16.mxu0 0
        %2165 = vmatpush1.bf16.msra.mxu0 %v2056
        %2166 = vmatprep.subr.bf16.mxu0 0
        %2167 = vmatpush1.bf16.msra.mxu0 %v2057
        %2168 = vmatprep.subr.bf16.mxu0 0
        %2169 = vmatpush1.bf16.msra.mxu0 %v2058
        %2170 = vmatprep.subr.bf16.mxu0 0
        %2171 = vmatpush1.bf16.msra.mxu0 %v2059
        %2172 = vmatprep.subr.bf16.mxu0 0
        %2173 = vmatpush1.bf16.msra.mxu0 0
        %2174 = vmatprep.subr.bf16.mxu0 0
        %2175 = vmatpush1.bf16.msra.mxu0 0
        %2176 = vmatprep.subr.bf16.mxu0 0
        %2177 = vmatpush1.bf16.msra.mxu0 0
        %2178 = vmatprep.subr.bf16.mxu0 0
        %2179 = vmatpush1.bf16.msra.mxu0 0
        %2180 = vmatprep.subr.bf16.mxu0 0
        %2181 = vmatpush1.bf16.msra.mxu0 0
        %2182 = vmatprep.subr.bf16.mxu0 0
        %2183 = vmatpush1.bf16.msra.mxu0 0
        %2184 = vmatprep.subr.bf16.mxu0 0
        %2185 = vmatpush1.bf16.msra.mxu0 0
        %2186 = vmatprep.subr.bf16.mxu0 0
        %2187 = vmatpush1.bf16.msra.mxu0 0
        %2188 = vmatprep.mubr.bf16.mxu0 0
        %2189 = vmatmul.mubr.bf16.gmra.mrb[0].mxu0 %v2097
        %v2190 = vpop.f32.mrb[0].mxu0
        %v2191 = vadd.f32 %v2142, %v2190
        %v2192 = vpop.f32.mrb[0].mxu0
        %v2193 = vpop.f32.mrb[0].mxu0
        %v2194 = vadd.f32 %v2145, %v2193
        %v2195 = vpop.f32.mrb[0].mxu0
        %2196 = vmatprep.mubr.bf16.mxu0 0
        %2197 = vmatmul.mubr.bf16.gmra.mrb[0].mxu0 %v2100
        %v2198 = vpop.f32.mrb[0].mxu0
        %v2199 = vadd.f32 %v2150, %v2198
        %v2200 = vpop.f32.mrb[0].mxu0
        %v2201 = vpop.f32.mrb[0].mxu0
        %v2202 = vadd.f32 %v2153, %v2201
        %v2203 = vpop.f32.mrb[0].mxu0
        %2204 = vdwg.mxu0
        %2205 = vst [vmem:[%s1007] sm:$0xff] %v2191
        %2206 = vst [vmem:[%s1007 + $0x8] sm:$0xff] %v2194
        %2207 = vst [vmem:[%s1007 + $0x10] sm:$0xff] %v2199
        %2208 = vst [vmem:[%s1007 + $0x18] sm:$0xff] %v2202
        %s2209 = sand.u32 %s183, 1
        %s2210 = sand.u32 %s183, 1
        %s2211 = smul.addr %s2210, 32
        %s2212 = scalar_lea.vmem [#allocation5], %s2211
        // Predicated region
        $region158: #{bayesian_linear.1} parent=144 // pred_check
          %p2213 = pneg %p193
        $region159: #{bayesian_linear.1} parent=144 // pred_check_branch
          %2215 = sbr.rel (%p2213) target = $region161
        $region160: #{bayesian_linear.1} parent=144 // pred_region
          %s2216 = smul.u32 4, %s21
          %s2217 = smul.addr %s2216, 2
          %s2218 = sadd.s32 %s22, %s2217
          %s2219 = smul.addr %s2218, 8
          %s2220 = scalar_lea.vmem %s5, %s2219
          // Predicated region
          $region162: #{bayesian_linear.1} parent=160 // pred_check
            _
          $region163: #{bayesian_linear.1} parent=160 // pred_check_branch
            %2222 = sbr.rel (0) target = $region165
          $region164: #{bayesian_linear.1} parent=160 // pred_region
            // Predicated region
            $region166: #{bayesian_linear.1} parent=164 // pred_check
              _
            $region167: #{bayesian_linear.1} parent=164 // pred_check_branch
              %2224 = sbr.rel (0) target = $region169
            $region168: #{bayesian_linear.1} parent=164 // pred_region
              // Predicated region
              $region181: #{bayesian_linear.1} parent=168 // pred_check
                _
              $region182: #{bayesian_linear.1} parent=168 // pred_check_branch
                %2245 = sbr.rel (0) target = $region184
              $region183: #{bayesian_linear.1} parent=168 // pred_region
                loop: start=0, step=1, limit=1
                $region185: #{bayesian_linear.1} parent=183 // loop_pre_header
                  _
                $region186: #{bayesian_linear.1} parent=183 // loop_header
                  %s2247 = sphi 0, %s2251
                  %p2248 = scmp.ge.s32.totalorder %s2247, 1
                  %s2252 = sphi %s2212, %s2212
                  %s2253 = sphi %s2220, %s2220
                $region187: #{bayesian_linear.1} parent=183 // loop_header_branch
                  %2250 = sbr.rel (%p2248) target = $region191
                $region188: #{bayesian_linear.1} parent=183 // loop_body
                  %v2254 = vld [vmem:[%s2252] sm:$0xff]
                  %2255 = vst [vmem:[%s2253] sm:$0xff] %v2254
                  %v2256 = vld [vmem:[%s2252 + $0x8] sm:$0xff]
                  %2257 = vst [vmem:[%s2253 + $0x10] sm:$0xff] %v2256
                  %v2258 = vld [vmem:[%s2252 + $0x10] sm:$0xff]
                  %2259 = vst [vmem:[%s2253 + $0x20] sm:$0xff] %v2258
                  %v2260 = vld [vmem:[%s2252 + $0x18] sm:$0xff]
                  %2261 = vst [vmem:[%s2253 + $0x30] sm:$0xff] %v2260
                $region189: #{bayesian_linear.1} parent=183 // loop_footer
                  %s2251 = sadd.s32 1, %s2247
                $region190: #{bayesian_linear.1} parent=183 // loop_footer_branch
                  %2246 = sbr.rel target = $region186
                $region191: #{bayesian_linear.1} parent=183 // loop_exit
                  _
              $region184: #{bayesian_linear.1} parent=168 // pred_fallthru
                _
              // Predicated region
              $region192: #{bayesian_linear.1} parent=168 // pred_check
                _
              $region193: #{bayesian_linear.1} parent=168 // pred_check_branch
                %2263 = sbr.rel target = $region195
              $region194: #{bayesian_linear.1} parent=168 // pred_region
                _
              $region195: #{bayesian_linear.1} parent=168 // pred_fallthru
                _
            $region169: #{bayesian_linear.1} parent=164 // pred_fallthru
              _
            // Predicated region
            $region170: #{bayesian_linear.1} parent=164 // pred_check
              _
            $region171: #{bayesian_linear.1} parent=164 // pred_check_branch
              %2226 = sbr.rel target = $region173
            $region172: #{bayesian_linear.1} parent=164 // pred_region
              loop: start=0, step=1, limit=1
              $region174: #{bayesian_linear.1} parent=172 // loop_pre_header
                _
              $region175: #{bayesian_linear.1} parent=172 // loop_header
                %s2229 = sphi 0, %s2233
                %p2230 = scmp.ge.s32.totalorder %s2229, 1
                %s2234 = sphi %s2212, %s2212
                %s2235 = sphi %s2220, %s2220
              $region176: #{bayesian_linear.1} parent=172 // loop_header_branch
                %2232 = sbr.rel (%p2230) target = $region180
              $region177: #{bayesian_linear.1} parent=172 // loop_body
                %v2236 = vld [vmem:[%s2234] sm:$0xff]
                %2237 = vst [vmem:[%s2235] sm:$0xff] %v2236
                %v2238 = vld [vmem:[%s2234 + $0x8] sm:$0xff]
                %2239 = vst [vmem:[%s2235 + $0x10] sm:$0xff] %v2238
                %v2240 = vld [vmem:[%s2234 + $0x10] sm:$0xff]
                %2241 = vst [vmem:[%s2235 + $0x20] sm:$0xff] %v2240
                %v2242 = vld [vmem:[%s2234 + $0x18] sm:$0xff]
                %2243 = vst [vmem:[%s2235 + $0x30] sm:$0xff] %v2242
              $region178: #{bayesian_linear.1} parent=172 // loop_footer
                %s2233 = sadd.s32 1, %s2229
              $region179: #{bayesian_linear.1} parent=172 // loop_footer_branch
                %2228 = sbr.rel target = $region175
              $region180: #{bayesian_linear.1} parent=172 // loop_exit
                _
            $region173: #{bayesian_linear.1} parent=164 // pred_fallthru
              _
          $region165: #{bayesian_linear.1} parent=160 // pred_fallthru
            _
          %2264 = vnop
        $region161: #{bayesian_linear.1} parent=144 // pred_fallthru
          _
      $region145: #{bayesian_linear.1} parent=5 // pred_fallthru
        _
      %p2265 = scmp.le.s32.totalorder 2, %s11
      // Predicated region
      $region196: #{bayesian_linear.1} parent=5 // pred_check
        %p2266 = pneg %p2265
      $region197: #{bayesian_linear.1} parent=5 // pred_check_branch
        %2268 = sbr.rel (%p2266) target = $region199
      $region198: #{bayesian_linear.1} parent=5 // pred_region
        %s2269 = ssub.s32 %s11, 2
        // Predicated region
        $region200: #{bayesian_linear.1} parent=198 // pred_check
          %p2270 = pneg %p199
        $region201: #{bayesian_linear.1} parent=198 // pred_check_branch
          %2272 = sbr.rel (%p2270) target = $region203
        $region202: #{bayesian_linear.1} parent=198 // pred_region
          %s2273 = sand.u32 %s184, 1
          %s2274 = sand.u32 %s184, 1
          %s2275 = smul.addr %s2274, 32
          %s2276 = scalar_lea.vmem [#allocation5], %s2275
        $region203: #{bayesian_linear.1} parent=198 // pred_fallthru
          _
      $region199: #{bayesian_linear.1} parent=5 // pred_fallthru
        _
    $region6: #{bayesian_linear.1} parent=1 // loop_footer
      %s15 = sadd.s32 1, %s11
    $region7: #{bayesian_linear.1} parent=1 // loop_footer_branch
      %10 = sbr.rel target = $region3
    $region8: #{bayesian_linear.1} parent=1 // loop_exit
      _

</llo_original>
